<compile_context>
chip_gen: v7x
topology: tpu7x:2x2x1
jax: 0.10.0
libtpu: 0.0.40
codegen_flags: <defaults>
</compile_context>

<pallas_src>
import functools

import numpy as np
import jax
import jax.numpy as jnp
from jax.experimental import pallas as pl
from jax.experimental.pallas import tpu as pltpu


def dblock_kernel(mask_ref, x_ref, w1_ref, b1_ref, w2_ref, b2_ref, o_ref,
                  *, H, W, C, num_res):
    """One image per grid step, all math in the lane-dense (C, H*W) layout.

    mask_ref: (9, C, HW)   f32 border masks, one per 3x3 tap
    x_ref   : (1, C, HW)   input image (flattened NCHW)
    w*_ref  : (R*9, C, C)  per-(block, tap) weight matrices, (Cout, Cin)
    b*_ref  : (R, C, 1)    per-block biases
    o_ref   : (1, C, HW)
    """
    HW = H * W

    def conv3x3(v, w_ref, b_ref, r):
        # 3x3 "same" conv = sum over 9 taps of  W_tap @ shift(v, tap), where
        # the spatial shift is a lane rotation of the flattened HW axis and a
        # zero mask handles the image border (zero padding).
        acc = None
        for t in range(9):
            sy, sx = t // 3 - 1, t % 3 - 1          # tap offsets in {-1,0,1}
            s = sy * W + sx                         # flattened lane shift
            if s == 0:
                shifted = v                         # center tap: no shift/mask
            else:
                shifted = pltpu.roll(v, (-s) % HW, 1) * mask_ref[t]
            y = jnp.dot(w_ref[r * 9 + t], shifted,
                        preferred_element_type=jnp.float32)
            acc = y if acc is None else acc + y
        return acc + b_ref[r]                       # (C, HW) + (C, 1)

    def res_block(r, v):
        y = conv3x3(v, w1_ref, b1_ref, r)
        y = jnp.maximum(y, 0.0)
        y = conv3x3(y, w2_ref, b2_ref, r)
        return v + y

    o_ref[0] = jax.lax.fori_loop(0, num_res, res_block, x_ref[0])


def _tap_masks(H, W, C):
    """(9, C, H*W) f32: mask[t] zeroes lanes whose shifted source pixel for
    3x3 tap t falls outside the image (zero "same" padding)."""
    HW = H * W
    ys, xs = np.divmod(np.arange(HW), W)
    masks = np.empty((9, C, HW), np.float32)
    for t in range(9):
        sy, sx = t // 3 - 1, t % 3 - 1
        ok = ((ys + sy >= 0) & (ys + sy < H) &
              (xs + sx >= 0) & (xs + sx < W))
        masks[t] = np.broadcast_to(ok.astype(np.float32), (C, HW))
    return jnp.asarray(masks)


@functools.partial(jax.jit, static_argnames=())
def dblock_forward(x_nchw, w1, b1, w2, b2):
    """x_nchw: (N, C, H, W) f32; w*: (R, 3, 3, Cin, Cout); b*: (R, C)."""
    N, C, H, W = x_nchw.shape
    R = w1.shape[0]
    HW = H * W

    # NCHW -> (N, C, H*W): a pure reshape, no HBM transpose.
    x = x_nchw.reshape(N, C, HW).astype(jnp.float32)

    # (R, ky, kx, Cin, Cout) -> (R*9, Cout, Cin): one small left-operand
    # matrix per (residual block, tap), indexed as r*9 + ky*3 + kx.
    w1_k = jnp.transpose(w1, (0, 1, 2, 4, 3)).reshape(R * 9, C, C).astype(jnp.float32)
    w2_k = jnp.transpose(w2, (0, 1, 2, 4, 3)).reshape(R * 9, C, C).astype(jnp.float32)
    b1_k = b1.reshape(R, C, 1).astype(jnp.float32)
    b2_k = b2.reshape(R, C, 1).astype(jnp.float32)
    masks = _tap_masks(H, W, C)

    kernel = functools.partial(dblock_kernel, H=H, W=W, C=C, num_res=R)

    out = pl.pallas_call(
        kernel,
        out_shape=jax.ShapeDtypeStruct((N, C, HW), jnp.float32),
        grid_spec=pltpu.PrefetchScalarGridSpec(
            num_scalar_prefetch=0,
            grid=(N,),
            in_specs=[
                pl.BlockSpec((9, C, HW), lambda n: (0, 0, 0)),      # masks
                pl.BlockSpec((1, C, HW), lambda n: (n, 0, 0)),      # x
                pl.BlockSpec((R * 9, C, C), lambda n: (0, 0, 0)),   # w1
                pl.BlockSpec((R, C, 1), lambda n: (0, 0, 0)),       # b1
                pl.BlockSpec((R * 9, C, C), lambda n: (0, 0, 0)),   # w2
                pl.BlockSpec((R, C, 1), lambda n: (0, 0, 0)),       # b2
            ],
            out_specs=pl.BlockSpec((1, C, HW), lambda n: (n, 0, 0)),
        ),
        compiler_params=pltpu.CompilerParams(
            dimension_semantics=("parallel",)),
    )(masks, x, w1_k, b1_k, w2_k, b2_k)

    return out.reshape(N, C, H, W)


def dblock_reference(x_nchw, w1, b1, w2, b2):
    """Pure-JAX reference (lax conv), same semantics as the PyTorch module."""
    x = jnp.transpose(x_nchw, (0, 2, 3, 1)).astype(jnp.float32)
    dn = ('NHWC', 'HWIO', 'NHWC')
    for r in range(w1.shape[0]):
        y = jax.lax.conv_general_dilated(x, w1[r], (1, 1), 'SAME',
                                         dimension_numbers=dn) + b1[r]
        y = jnp.maximum(y, 0.0)
        y = jax.lax.conv_general_dilated(y, w2[r], (1, 1), 'SAME',
                                         dimension_numbers=dn) + b2[r]
        x = x + y
    return jnp.transpose(x, (0, 3, 1, 2))


if __name__ == "__main__":
    N, C, H, W = 2, 4, 16, 16
    NUM_RES = 8

    key = jax.random.PRNGKey(0)
    kx, kw1, kb1, kw2, kb2 = jax.random.split(key, 5)

    x = jax.random.normal(kx, (N, C, H, W), dtype=jnp.float32)

    # Deterministic synthetic parameters (Kaiming-ish scale for 3x3 convs).
    fan_in = 9 * C
    std = (2.0 / fan_in) ** 0.5
    w1 = jax.random.normal(kw1, (NUM_RES, 3, 3, C, C), jnp.float32) * std
    b1 = jax.random.normal(kb1, (NUM_RES, C), jnp.float32) * 0.01
    w2 = jax.random.normal(kw2, (NUM_RES, 3, 3, C, C), jnp.float32) * std
    b2 = jax.random.normal(kb2, (NUM_RES, C), jnp.float32) * 0.01

    out = jax.block_until_ready(dblock_forward(x, w1, b1, w2, b2))
    ref = jax.block_until_ready(dblock_reference(x, w1, b1, w2, b2))

    max_err = float(jnp.max(jnp.abs(out - ref)))
    scale = 1.0 + float(jnp.max(jnp.abs(ref)))
    assert out.shape == (N, C, H, W), out.shape
    assert max_err < 1e-3 * scale, f"mismatch: max_err={max_err}"

    print("KERNEL_OK")
</pallas_src>

<mosaic_0001>
module attributes {stable_mosaic.version = 11 : i64} {
  func.func @dblock_kernel(%arg0: i32, %arg1: memref<9x4x256xf32, #tpu.memory_space<vmem>>, %arg2: memref<1x4x256xf32, #tpu.memory_space<vmem>>, %arg3: memref<72x4x4xf32, #tpu.memory_space<vmem>>, %arg4: memref<8x4x1xf32, #tpu.memory_space<vmem>>, %arg5: memref<72x4x4xf32, #tpu.memory_space<vmem>>, %arg6: memref<8x4x1xf32, #tpu.memory_space<vmem>>, %arg7: memref<1x4x256xf32, #tpu.memory_space<vmem>>) attributes {dimension_semantics = [#tpu.dimension_semantics<parallel>], iteration_bounds = array<i64: 2>, scalar_prefetch = 0 : i64, scratch_operands = 0 : i64, tpu.core_type = #tpu.core_type<tc>, window_params = [{pipeline_mode = #tpu.pipeline_mode<synchronous>, transform_indices = @transform_0, window_bounds = array<i64: 9, 4, 256>}, {transform_indices = @transform_1, window_bounds = array<i64: 1, 4, 256>}, {pipeline_mode = #tpu.pipeline_mode<synchronous>, transform_indices = @transform_2, window_bounds = array<i64: 72, 4, 4>}, {pipeline_mode = #tpu.pipeline_mode<synchronous>, transform_indices = @transform_3, window_bounds = array<i64: 8, 4, 1>}, {pipeline_mode = #tpu.pipeline_mode<synchronous>, transform_indices = @transform_4, window_bounds = array<i64: 72, 4, 4>}, {pipeline_mode = #tpu.pipeline_mode<synchronous>, transform_indices = @transform_5, window_bounds = array<i64: 8, 4, 1>}, {transform_indices = @transform_6, window_bounds = array<i64: 1, 4, 256>}]} {
    %c0 = arith.constant 0 : index
    %c0_0 = arith.constant 0 : index
    %c0_1 = arith.constant 0 : index
    %0 = vector.load %arg2[%c0, %c0_0, %c0_1] : memref<1x4x256xf32, #tpu.memory_space<vmem>>, vector<1x4x256xf32>
    %1 = vector.shape_cast %0 : vector<1x4x256xf32> to vector<4x256xf32>
    %c0_i32 = arith.constant 0 : i32
    %c8_i32 = arith.constant 8 : i32
    %2 = arith.addi %c0_i32, %c8_i32 : i32
    %c1_i32 = arith.constant 1 : i32
    %3 = scf.for %arg8 = %c0_i32 to %2 step %c1_i32 iter_args(%arg9 = %1) -> (vector<4x256xf32>)  : i32 {
      %c17_i32 = arith.constant 17 : i32
      %7 = tpu.dynamic_rotate %arg9 by %c17_i32 dim 1 : vector<4x256xf32>, i32 -> vector<4x256xf32>
      %c0_6 = arith.constant 0 : index
      %c0_7 = arith.constant 0 : index
      %c0_8 = arith.constant 0 : index
      %8 = vector.load %arg1[%c0_6, %c0_7, %c0_8] : memref<9x4x256xf32, #tpu.memory_space<vmem>>, vector<1x4x256xf32>
      %9 = vector.shape_cast %8 : vector<1x4x256xf32> to vector<4x256xf32>
      %10 = arith.mulf %7, %9 : vector<4x256xf32>
      %c9_i32 = arith.constant 9 : i32
      %11 = arith.muli %arg8, %c9_i32 : i32
      %c0_i32_9 = arith.constant 0 : i32
      %12 = arith.addi %11, %c0_i32_9 : i32
      %13 = arith.index_cast %12 : i32 to index
      %c0_10 = arith.constant 0 : index
      %c0_11 = arith.constant 0 : index
      %14 = vector.load %arg3[%13, %c0_10, %c0_11] : memref<72x4x4xf32, #tpu.memory_space<vmem>>, vector<1x4x4xf32>
      %15 = vector.shape_cast %14 : vector<1x4x4xf32> to vector<4x4xf32>
      %cst = arith.constant dense<0.000000e+00> : vector<4x256xf32>
      %16 = tpu.matmul %15, %10, %cst {dimension_numbers = #tpu.dot_dimension_numbers<[1], [0], [0], [1], [0, 0, 1, 1], [], []>} : vector<4x4xf32>, vector<4x256xf32>, vector<4x256xf32> -> vector<4x256xf32>
      %c16_i32 = arith.constant 16 : i32
      %17 = tpu.dynamic_rotate %arg9 by %c16_i32 dim 1 : vector<4x256xf32>, i32 -> vector<4x256xf32>
      %c1 = arith.constant 1 : index
      %c0_12 = arith.constant 0 : index
      %c0_13 = arith.constant 0 : index
      %18 = vector.load %arg1[%c1, %c0_12, %c0_13] : memref<9x4x256xf32, #tpu.memory_space<vmem>>, vector<1x4x256xf32>
      %19 = vector.shape_cast %18 : vector<1x4x256xf32> to vector<4x256xf32>
      %20 = arith.mulf %17, %19 : vector<4x256xf32>
      %c9_i32_14 = arith.constant 9 : i32
      %21 = arith.muli %arg8, %c9_i32_14 : i32
      %c1_i32_15 = arith.constant 1 : i32
      %22 = arith.addi %21, %c1_i32_15 : i32
      %23 = arith.index_cast %22 : i32 to index
      %c0_16 = arith.constant 0 : index
      %c0_17 = arith.constant 0 : index
      %24 = vector.load %arg3[%23, %c0_16, %c0_17] : memref<72x4x4xf32, #tpu.memory_space<vmem>>, vector<1x4x4xf32>
      %25 = vector.shape_cast %24 : vector<1x4x4xf32> to vector<4x4xf32>
      %cst_18 = arith.constant dense<0.000000e+00> : vector<4x256xf32>
      %26 = tpu.matmul %25, %20, %cst_18 {dimension_numbers = #tpu.dot_dimension_numbers<[1], [0], [0], [1], [0, 0, 1, 1], [], []>} : vector<4x4xf32>, vector<4x256xf32>, vector<4x256xf32> -> vector<4x256xf32>
      %27 = arith.addf %16, %26 : vector<4x256xf32>
      %c15_i32 = arith.constant 15 : i32
      %28 = tpu.dynamic_rotate %arg9 by %c15_i32 dim 1 : vector<4x256xf32>, i32 -> vector<4x256xf32>
      %c2 = arith.constant 2 : index
      %c0_19 = arith.constant 0 : index
      %c0_20 = arith.constant 0 : index
      %29 = vector.load %arg1[%c2, %c0_19, %c0_20] : memref<9x4x256xf32, #tpu.memory_space<vmem>>, vector<1x4x256xf32>
      %30 = vector.shape_cast %29 : vector<1x4x256xf32> to vector<4x256xf32>
      %31 = arith.mulf %28, %30 : vector<4x256xf32>
      %c9_i32_21 = arith.constant 9 : i32
      %32 = arith.muli %arg8, %c9_i32_21 : i32
      %c2_i32 = arith.constant 2 : i32
      %33 = arith.addi %32, %c2_i32 : i32
      %34 = arith.index_cast %33 : i32 to index
      %c0_22 = arith.constant 0 : index
      %c0_23 = arith.constant 0 : index
      %35 = vector.load %arg3[%34, %c0_22, %c0_23] : memref<72x4x4xf32, #tpu.memory_space<vmem>>, vector<1x4x4xf32>
      %36 = vector.shape_cast %35 : vector<1x4x4xf32> to vector<4x4xf32>
      %cst_24 = arith.constant dense<0.000000e+00> : vector<4x256xf32>
      %37 = tpu.matmul %36, %31, %cst_24 {dimension_numbers = #tpu.dot_dimension_numbers<[1], [0], [0], [1], [0, 0, 1, 1], [], []>} : vector<4x4xf32>, vector<4x256xf32>, vector<4x256xf32> -> vector<4x256xf32>
      %38 = arith.addf %27, %37 : vector<4x256xf32>
      %c1_i32_25 = arith.constant 1 : i32
      %39 = tpu.dynamic_rotate %arg9 by %c1_i32_25 dim 1 : vector<4x256xf32>, i32 -> vector<4x256xf32>
      %c3 = arith.constant 3 : index
      %c0_26 = arith.constant 0 : index
      %c0_27 = arith.constant 0 : index
      %40 = vector.load %arg1[%c3, %c0_26, %c0_27] : memref<9x4x256xf32, #tpu.memory_space<vmem>>, vector<1x4x256xf32>
      %41 = vector.shape_cast %40 : vector<1x4x256xf32> to vector<4x256xf32>
      %42 = arith.mulf %39, %41 : vector<4x256xf32>
      %c9_i32_28 = arith.constant 9 : i32
      %43 = arith.muli %arg8, %c9_i32_28 : i32
      %c3_i32 = arith.constant 3 : i32
      %44 = arith.addi %43, %c3_i32 : i32
      %45 = arith.index_cast %44 : i32 to index
      %c0_29 = arith.constant 0 : index
      %c0_30 = arith.constant 0 : index
      %46 = vector.load %arg3[%45, %c0_29, %c0_30] : memref<72x4x4xf32, #tpu.memory_space<vmem>>, vector<1x4x4xf32>
      %47 = vector.shape_cast %46 : vector<1x4x4xf32> to vector<4x4xf32>
      %cst_31 = arith.constant dense<0.000000e+00> : vector<4x256xf32>
      %48 = tpu.matmul %47, %42, %cst_31 {dimension_numbers = #tpu.dot_dimension_numbers<[1], [0], [0], [1], [0, 0, 1, 1], [], []>} : vector<4x4xf32>, vector<4x256xf32>, vector<4x256xf32> -> vector<4x256xf32>
      %49 = arith.addf %38, %48 : vector<4x256xf32>
      %c9_i32_32 = arith.constant 9 : i32
      %50 = arith.muli %arg8, %c9_i32_32 : i32
      %c4_i32 = arith.constant 4 : i32
      %51 = arith.addi %50, %c4_i32 : i32
      %52 = arith.index_cast %51 : i32 to index
      %c0_33 = arith.constant 0 : index
      %c0_34 = arith.constant 0 : index
      %53 = vector.load %arg3[%52, %c0_33, %c0_34] : memref<72x4x4xf32, #tpu.memory_space<vmem>>, vector<1x4x4xf32>
      %54 = vector.shape_cast %53 : vector<1x4x4xf32> to vector<4x4xf32>
      %cst_35 = arith.constant dense<0.000000e+00> : vector<4x256xf32>
      %55 = tpu.matmul %54, %arg9, %cst_35 {dimension_numbers = #tpu.dot_dimension_numbers<[1], [0], [0], [1], [0, 0, 1, 1], [], []>} : vector<4x4xf32>, vector<4x256xf32>, vector<4x256xf32> -> vector<4x256xf32>
      %56 = arith.addf %49, %55 : vector<4x256xf32>
      %c255_i32 = arith.constant 255 : i32
      %57 = tpu.dynamic_rotate %arg9 by %c255_i32 dim 1 : vector<4x256xf32>, i32 -> vector<4x256xf32>
      %c5 = arith.constant 5 : index
      %c0_36 = arith.constant 0 : index
      %c0_37 = arith.constant 0 : index
      %58 = vector.load %arg1[%c5, %c0_36, %c0_37] : memref<9x4x256xf32, #tpu.memory_space<vmem>>, vector<1x4x256xf32>
      %59 = vector.shape_cast %58 : vector<1x4x256xf32> to vector<4x256xf32>
      %60 = arith.mulf %57, %59 : vector<4x256xf32>
      %c9_i32_38 = arith.constant 9 : i32
      %61 = arith.muli %arg8, %c9_i32_38 : i32
      %c5_i32 = arith.constant 5 : i32
      %62 = arith.addi %61, %c5_i32 : i32
      %63 = arith.index_cast %62 : i32 to index
      %c0_39 = arith.constant 0 : index
      %c0_40 = arith.constant 0 : index
      %64 = vector.load %arg3[%63, %c0_39, %c0_40] : memref<72x4x4xf32, #tpu.memory_space<vmem>>, vector<1x4x4xf32>
      %65 = vector.shape_cast %64 : vector<1x4x4xf32> to vector<4x4xf32>
      %cst_41 = arith.constant dense<0.000000e+00> : vector<4x256xf32>
      %66 = tpu.matmul %65, %60, %cst_41 {dimension_numbers = #tpu.dot_dimension_numbers<[1], [0], [0], [1], [0, 0, 1, 1], [], []>} : vector<4x4xf32>, vector<4x256xf32>, vector<4x256xf32> -> vector<4x256xf32>
      %67 = arith.addf %56, %66 : vector<4x256xf32>
      %c241_i32 = arith.constant 241 : i32
      %68 = tpu.dynamic_rotate %arg9 by %c241_i32 dim 1 : vector<4x256xf32>, i32 -> vector<4x256xf32>
      %c6 = arith.constant 6 : index
      %c0_42 = arith.constant 0 : index
      %c0_43 = arith.constant 0 : index
      %69 = vector.load %arg1[%c6, %c0_42, %c0_43] : memref<9x4x256xf32, #tpu.memory_space<vmem>>, vector<1x4x256xf32>
      %70 = vector.shape_cast %69 : vector<1x4x256xf32> to vector<4x256xf32>
      %71 = arith.mulf %68, %70 : vector<4x256xf32>
      %c9_i32_44 = arith.constant 9 : i32
      %72 = arith.muli %arg8, %c9_i32_44 : i32
      %c6_i32 = arith.constant 6 : i32
      %73 = arith.addi %72, %c6_i32 : i32
      %74 = arith.index_cast %73 : i32 to index
      %c0_45 = arith.constant 0 : index
      %c0_46 = arith.constant 0 : index
      %75 = vector.load %arg3[%74, %c0_45, %c0_46] : memref<72x4x4xf32, #tpu.memory_space<vmem>>, vector<1x4x4xf32>
      %76 = vector.shape_cast %75 : vector<1x4x4xf32> to vector<4x4xf32>
      %cst_47 = arith.constant dense<0.000000e+00> : vector<4x256xf32>
      %77 = tpu.matmul %76, %71, %cst_47 {dimension_numbers = #tpu.dot_dimension_numbers<[1], [0], [0], [1], [0, 0, 1, 1], [], []>} : vector<4x4xf32>, vector<4x256xf32>, vector<4x256xf32> -> vector<4x256xf32>
      %78 = arith.addf %67, %77 : vector<4x256xf32>
      %c240_i32 = arith.constant 240 : i32
      %79 = tpu.dynamic_rotate %arg9 by %c240_i32 dim 1 : vector<4x256xf32>, i32 -> vector<4x256xf32>
      %c7 = arith.constant 7 : index
      %c0_48 = arith.constant 0 : index
      %c0_49 = arith.constant 0 : index
      %80 = vector.load %arg1[%c7, %c0_48, %c0_49] : memref<9x4x256xf32, #tpu.memory_space<vmem>>, vector<1x4x256xf32>
      %81 = vector.shape_cast %80 : vector<1x4x256xf32> to vector<4x256xf32>
      %82 = arith.mulf %79, %81 : vector<4x256xf32>
      %c9_i32_50 = arith.constant 9 : i32
      %83 = arith.muli %arg8, %c9_i32_50 : i32
      %c7_i32 = arith.constant 7 : i32
      %84 = arith.addi %83, %c7_i32 : i32
      %85 = arith.index_cast %84 : i32 to index
      %c0_51 = arith.constant 0 : index
      %c0_52 = arith.constant 0 : index
      %86 = vector.load %arg3[%85, %c0_51, %c0_52] : memref<72x4x4xf32, #tpu.memory_space<vmem>>, vector<1x4x4xf32>
      %87 = vector.shape_cast %86 : vector<1x4x4xf32> to vector<4x4xf32>
      %cst_53 = arith.constant dense<0.000000e+00> : vector<4x256xf32>
      %88 = tpu.matmul %87, %82, %cst_53 {dimension_numbers = #tpu.dot_dimension_numbers<[1], [0], [0], [1], [0, 0, 1, 1], [], []>} : vector<4x4xf32>, vector<4x256xf32>, vector<4x256xf32> -> vector<4x256xf32>
      %89 = arith.addf %78, %88 : vector<4x256xf32>
      %c239_i32 = arith.constant 239 : i32
      %90 = tpu.dynamic_rotate %arg9 by %c239_i32 dim 1 : vector<4x256xf32>, i32 -> vector<4x256xf32>
      %c8 = arith.constant 8 : index
      %c0_54 = arith.constant 0 : index
      %c0_55 = arith.constant 0 : index
      %91 = vector.load %arg1[%c8, %c0_54, %c0_55] : memref<9x4x256xf32, #tpu.memory_space<vmem>>, vector<1x4x256xf32>
      %92 = vector.shape_cast %91 : vector<1x4x256xf32> to vector<4x256xf32>
      %93 = arith.mulf %90, %92 : vector<4x256xf32>
      %c9_i32_56 = arith.constant 9 : i32
      %94 = arith.muli %arg8, %c9_i32_56 : i32
      %c8_i32_57 = arith.constant 8 : i32
      %95 = arith.addi %94, %c8_i32_57 : i32
      %96 = arith.index_cast %95 : i32 to index
      %c0_58 = arith.constant 0 : index
      %c0_59 = arith.constant 0 : index
      %97 = vector.load %arg3[%96, %c0_58, %c0_59] : memref<72x4x4xf32, #tpu.memory_space<vmem>>, vector<1x4x4xf32>
      %98 = vector.shape_cast %97 : vector<1x4x4xf32> to vector<4x4xf32>
      %cst_60 = arith.constant dense<0.000000e+00> : vector<4x256xf32>
      %99 = tpu.matmul %98, %93, %cst_60 {dimension_numbers = #tpu.dot_dimension_numbers<[1], [0], [0], [1], [0, 0, 1, 1], [], []>} : vector<4x4xf32>, vector<4x256xf32>, vector<4x256xf32> -> vector<4x256xf32>
      %100 = arith.addf %89, %99 : vector<4x256xf32>
      %101 = arith.index_cast %arg8 : i32 to index
      %c0_61 = arith.constant 0 : index
      %c0_62 = arith.constant 0 : index
      %102 = vector.load %arg4[%101, %c0_61, %c0_62] : memref<8x4x1xf32, #tpu.memory_space<vmem>>, vector<1x4x1xf32>
      %103 = vector.shape_cast %102 : vector<1x4x1xf32> to vector<4x1xf32>
      %104 = vector.broadcast %103 : vector<4x1xf32> to vector<4x256xf32>
      %105 = arith.addf %100, %104 : vector<4x256xf32>
      %cst_63 = arith.constant 0.000000e+00 : f32
      %106 = vector.broadcast %cst_63 : f32 to vector<4x256xf32>
      %107 = arith.maximumf %105, %106 : vector<4x256xf32>
      %c17_i32_64 = arith.constant 17 : i32
      %108 = tpu.dynamic_rotate %107 by %c17_i32_64 dim 1 : vector<4x256xf32>, i32 -> vector<4x256xf32>
      %c0_65 = arith.constant 0 : index
      %c0_66 = arith.constant 0 : index
      %c0_67 = arith.constant 0 : index
      %109 = vector.load %arg1[%c0_65, %c0_66, %c0_67] : memref<9x4x256xf32, #tpu.memory_space<vmem>>, vector<1x4x256xf32>
      %110 = vector.shape_cast %109 : vector<1x4x256xf32> to vector<4x256xf32>
      %111 = arith.mulf %108, %110 : vector<4x256xf32>
      %c9_i32_68 = arith.constant 9 : i32
      %112 = arith.muli %arg8, %c9_i32_68 : i32
      %c0_i32_69 = arith.constant 0 : i32
      %113 = arith.addi %112, %c0_i32_69 : i32
      %114 = arith.index_cast %113 : i32 to index
      %c0_70 = arith.constant 0 : index
      %c0_71 = arith.constant 0 : index
      %115 = vector.load %arg5[%114, %c0_70, %c0_71] : memref<72x4x4xf32, #tpu.memory_space<vmem>>, vector<1x4x4xf32>
      %116 = vector.shape_cast %115 : vector<1x4x4xf32> to vector<4x4xf32>
      %cst_72 = arith.constant dense<0.000000e+00> : vector<4x256xf32>
      %117 = tpu.matmul %116, %111, %cst_72 {dimension_numbers = #tpu.dot_dimension_numbers<[1], [0], [0], [1], [0, 0, 1, 1], [], []>} : vector<4x4xf32>, vector<4x256xf32>, vector<4x256xf32> -> vector<4x256xf32>
      %c16_i32_73 = arith.constant 16 : i32
      %118 = tpu.dynamic_rotate %107 by %c16_i32_73 dim 1 : vector<4x256xf32>, i32 -> vector<4x256xf32>
      %c1_74 = arith.constant 1 : index
      %c0_75 = arith.constant 0 : index
      %c0_76 = arith.constant 0 : index
      %119 = vector.load %arg1[%c1_74, %c0_75, %c0_76] : memref<9x4x256xf32, #tpu.memory_space<vmem>>, vector<1x4x256xf32>
      %120 = vector.shape_cast %119 : vector<1x4x256xf32> to vector<4x256xf32>
      %121 = arith.mulf %118, %120 : vector<4x256xf32>
      %c9_i32_77 = arith.constant 9 : i32
      %122 = arith.muli %arg8, %c9_i32_77 : i32
      %c1_i32_78 = arith.constant 1 : i32
      %123 = arith.addi %122, %c1_i32_78 : i32
      %124 = arith.index_cast %123 : i32 to index
      %c0_79 = arith.constant 0 : index
      %c0_80 = arith.constant 0 : index
      %125 = vector.load %arg5[%124, %c0_79, %c0_80] : memref<72x4x4xf32, #tpu.memory_space<vmem>>, vector<1x4x4xf32>
      %126 = vector.shape_cast %125 : vector<1x4x4xf32> to vector<4x4xf32>
      %cst_81 = arith.constant dense<0.000000e+00> : vector<4x256xf32>
      %127 = tpu.matmul %126, %121, %cst_81 {dimension_numbers = #tpu.dot_dimension_numbers<[1], [0], [0], [1], [0, 0, 1, 1], [], []>} : vector<4x4xf32>, vector<4x256xf32>, vector<4x256xf32> -> vector<4x256xf32>
      %128 = arith.addf %117, %127 : vector<4x256xf32>
      %c15_i32_82 = arith.constant 15 : i32
      %129 = tpu.dynamic_rotate %107 by %c15_i32_82 dim 1 : vector<4x256xf32>, i32 -> vector<4x256xf32>
      %c2_83 = arith.constant 2 : index
      %c0_84 = arith.constant 0 : index
      %c0_85 = arith.constant 0 : index
      %130 = vector.load %arg1[%c2_83, %c0_84, %c0_85] : memref<9x4x256xf32, #tpu.memory_space<vmem>>, vector<1x4x256xf32>
      %131 = vector.shape_cast %130 : vector<1x4x256xf32> to vector<4x256xf32>
      %132 = arith.mulf %129, %131 : vector<4x256xf32>
      %c9_i32_86 = arith.constant 9 : i32
      %133 = arith.muli %arg8, %c9_i32_86 : i32
      %c2_i32_87 = arith.constant 2 : i32
      %134 = arith.addi %133, %c2_i32_87 : i32
      %135 = arith.index_cast %134 : i32 to index
      %c0_88 = arith.constant 0 : index
      %c0_89 = arith.constant 0 : index
      %136 = vector.load %arg5[%135, %c0_88, %c0_89] : memref<72x4x4xf32, #tpu.memory_space<vmem>>, vector<1x4x4xf32>
      %137 = vector.shape_cast %136 : vector<1x4x4xf32> to vector<4x4xf32>
      %cst_90 = arith.constant dense<0.000000e+00> : vector<4x256xf32>
      %138 = tpu.matmul %137, %132, %cst_90 {dimension_numbers = #tpu.dot_dimension_numbers<[1], [0], [0], [1], [0, 0, 1, 1], [], []>} : vector<4x4xf32>, vector<4x256xf32>, vector<4x256xf32> -> vector<4x256xf32>
      %139 = arith.addf %128, %138 : vector<4x256xf32>
      %c1_i32_91 = arith.constant 1 : i32
      %140 = tpu.dynamic_rotate %107 by %c1_i32_91 dim 1 : vector<4x256xf32>, i32 -> vector<4x256xf32>
      %c3_92 = arith.constant 3 : index
      %c0_93 = arith.constant 0 : index
      %c0_94 = arith.constant 0 : index
      %141 = vector.load %arg1[%c3_92, %c0_93, %c0_94] : memref<9x4x256xf32, #tpu.memory_space<vmem>>, vector<1x4x256xf32>
      %142 = vector.shape_cast %141 : vector<1x4x256xf32> to vector<4x256xf32>
      %143 = arith.mulf %140, %142 : vector<4x256xf32>
      %c9_i32_95 = arith.constant 9 : i32
      %144 = arith.muli %arg8, %c9_i32_95 : i32
      %c3_i32_96 = arith.constant 3 : i32
      %145 = arith.addi %144, %c3_i32_96 : i32
      %146 = arith.index_cast %145 : i32 to index
      %c0_97 = arith.constant 0 : index
      %c0_98 = arith.constant 0 : index
      %147 = vector.load %arg5[%146, %c0_97, %c0_98] : memref<72x4x4xf32, #tpu.memory_space<vmem>>, vector<1x4x4xf32>
      %148 = vector.shape_cast %147 : vector<1x4x4xf32> to vector<4x4xf32>
      %cst_99 = arith.constant dense<0.000000e+00> : vector<4x256xf32>
      %149 = tpu.matmul %148, %143, %cst_99 {dimension_numbers = #tpu.dot_dimension_numbers<[1], [0], [0], [1], [0, 0, 1, 1], [], []>} : vector<4x4xf32>, vector<4x256xf32>, vector<4x256xf32> -> vector<4x256xf32>
      %150 = arith.addf %139, %149 : vector<4x256xf32>
      %c9_i32_100 = arith.constant 9 : i32
      %151 = arith.muli %arg8, %c9_i32_100 : i32
      %c4_i32_101 = arith.constant 4 : i32
      %152 = arith.addi %151, %c4_i32_101 : i32
      %153 = arith.index_cast %152 : i32 to index
      %c0_102 = arith.constant 0 : index
      %c0_103 = arith.constant 0 : index
      %154 = vector.load %arg5[%153, %c0_102, %c0_103] : memref<72x4x4xf32, #tpu.memory_space<vmem>>, vector<1x4x4xf32>
      %155 = vector.shape_cast %154 : vector<1x4x4xf32> to vector<4x4xf32>
      %cst_104 = arith.constant dense<0.000000e+00> : vector<4x256xf32>
      %156 = tpu.matmul %155, %107, %cst_104 {dimension_numbers = #tpu.dot_dimension_numbers<[1], [0], [0], [1], [0, 0, 1, 1], [], []>} : vector<4x4xf32>, vector<4x256xf32>, vector<4x256xf32> -> vector<4x256xf32>
      %157 = arith.addf %150, %156 : vector<4x256xf32>
      %c255_i32_105 = arith.constant 255 : i32
      %158 = tpu.dynamic_rotate %107 by %c255_i32_105 dim 1 : vector<4x256xf32>, i32 -> vector<4x256xf32>
      %c5_106 = arith.constant 5 : index
      %c0_107 = arith.constant 0 : index
      %c0_108 = arith.constant 0 : index
      %159 = vector.load %arg1[%c5_106, %c0_107, %c0_108] : memref<9x4x256xf32, #tpu.memory_space<vmem>>, vector<1x4x256xf32>
      %160 = vector.shape_cast %159 : vector<1x4x256xf32> to vector<4x256xf32>
      %161 = arith.mulf %158, %160 : vector<4x256xf32>
      %c9_i32_109 = arith.constant 9 : i32
      %162 = arith.muli %arg8, %c9_i32_109 : i32
      %c5_i32_110 = arith.constant 5 : i32
      %163 = arith.addi %162, %c5_i32_110 : i32
      %164 = arith.index_cast %163 : i32 to index
      %c0_111 = arith.constant 0 : index
      %c0_112 = arith.constant 0 : index
      %165 = vector.load %arg5[%164, %c0_111, %c0_112] : memref<72x4x4xf32, #tpu.memory_space<vmem>>, vector<1x4x4xf32>
      %166 = vector.shape_cast %165 : vector<1x4x4xf32> to vector<4x4xf32>
      %cst_113 = arith.constant dense<0.000000e+00> : vector<4x256xf32>
      %167 = tpu.matmul %166, %161, %cst_113 {dimension_numbers = #tpu.dot_dimension_numbers<[1], [0], [0], [1], [0, 0, 1, 1], [], []>} : vector<4x4xf32>, vector<4x256xf32>, vector<4x256xf32> -> vector<4x256xf32>
      %168 = arith.addf %157, %167 : vector<4x256xf32>
      %c241_i32_114 = arith.constant 241 : i32
      %169 = tpu.dynamic_rotate %107 by %c241_i32_114 dim 1 : vector<4x256xf32>, i32 -> vector<4x256xf32>
      %c6_115 = arith.constant 6 : index
      %c0_116 = arith.constant 0 : index
      %c0_117 = arith.constant 0 : index
      %170 = vector.load %arg1[%c6_115, %c0_116, %c0_117] : memref<9x4x256xf32, #tpu.memory_space<vmem>>, vector<1x4x256xf32>
      %171 = vector.shape_cast %170 : vector<1x4x256xf32> to vector<4x256xf32>
      %172 = arith.mulf %169, %171 : vector<4x256xf32>
      %c9_i32_118 = arith.constant 9 : i32
      %173 = arith.muli %arg8, %c9_i32_118 : i32
      %c6_i32_119 = arith.constant 6 : i32
      %174 = arith.addi %173, %c6_i32_119 : i32
      %175 = arith.index_cast %174 : i32 to index
      %c0_120 = arith.constant 0 : index
      %c0_121 = arith.constant 0 : index
      %176 = vector.load %arg5[%175, %c0_120, %c0_121] : memref<72x4x4xf32, #tpu.memory_space<vmem>>, vector<1x4x4xf32>
      %177 = vector.shape_cast %176 : vector<1x4x4xf32> to vector<4x4xf32>
      %cst_122 = arith.constant dense<0.000000e+00> : vector<4x256xf32>
      %178 = tpu.matmul %177, %172, %cst_122 {dimension_numbers = #tpu.dot_dimension_numbers<[1], [0], [0], [1], [0, 0, 1, 1], [], []>} : vector<4x4xf32>, vector<4x256xf32>, vector<4x256xf32> -> vector<4x256xf32>
      %179 = arith.addf %168, %178 : vector<4x256xf32>
      %c240_i32_123 = arith.constant 240 : i32
      %180 = tpu.dynamic_rotate %107 by %c240_i32_123 dim 1 : vector<4x256xf32>, i32 -> vector<4x256xf32>
      %c7_124 = arith.constant 7 : index
      %c0_125 = arith.constant 0 : index
      %c0_126 = arith.constant 0 : index
      %181 = vector.load %arg1[%c7_124, %c0_125, %c0_126] : memref<9x4x256xf32, #tpu.memory_space<vmem>>, vector<1x4x256xf32>
      %182 = vector.shape_cast %181 : vector<1x4x256xf32> to vector<4x256xf32>
      %183 = arith.mulf %180, %182 : vector<4x256xf32>
      %c9_i32_127 = arith.constant 9 : i32
      %184 = arith.muli %arg8, %c9_i32_127 : i32
      %c7_i32_128 = arith.constant 7 : i32
      %185 = arith.addi %184, %c7_i32_128 : i32
      %186 = arith.index_cast %185 : i32 to index
      %c0_129 = arith.constant 0 : index
      %c0_130 = arith.constant 0 : index
      %187 = vector.load %arg5[%186, %c0_129, %c0_130] : memref<72x4x4xf32, #tpu.memory_space<vmem>>, vector<1x4x4xf32>
      %188 = vector.shape_cast %187 : vector<1x4x4xf32> to vector<4x4xf32>
      %cst_131 = arith.constant dense<0.000000e+00> : vector<4x256xf32>
      %189 = tpu.matmul %188, %183, %cst_131 {dimension_numbers = #tpu.dot_dimension_numbers<[1], [0], [0], [1], [0, 0, 1, 1], [], []>} : vector<4x4xf32>, vector<4x256xf32>, vector<4x256xf32> -> vector<4x256xf32>
      %190 = arith.addf %179, %189 : vector<4x256xf32>
      %c239_i32_132 = arith.constant 239 : i32
      %191 = tpu.dynamic_rotate %107 by %c239_i32_132 dim 1 : vector<4x256xf32>, i32 -> vector<4x256xf32>
      %c8_133 = arith.constant 8 : index
      %c0_134 = arith.constant 0 : index
      %c0_135 = arith.constant 0 : index
      %192 = vector.load %arg1[%c8_133, %c0_134, %c0_135] : memref<9x4x256xf32, #tpu.memory_space<vmem>>, vector<1x4x256xf32>
      %193 = vector.shape_cast %192 : vector<1x4x256xf32> to vector<4x256xf32>
      %194 = arith.mulf %191, %193 : vector<4x256xf32>
      %c9_i32_136 = arith.constant 9 : i32
      %195 = arith.muli %arg8, %c9_i32_136 : i32
      %c8_i32_137 = arith.constant 8 : i32
      %196 = arith.addi %195, %c8_i32_137 : i32
      %197 = arith.index_cast %196 : i32 to index
      %c0_138 = arith.constant 0 : index
      %c0_139 = arith.constant 0 : index
      %198 = vector.load %arg5[%197, %c0_138, %c0_139] : memref<72x4x4xf32, #tpu.memory_space<vmem>>, vector<1x4x4xf32>
      %199 = vector.shape_cast %198 : vector<1x4x4xf32> to vector<4x4xf32>
      %cst_140 = arith.constant dense<0.000000e+00> : vector<4x256xf32>
      %200 = tpu.matmul %199, %194, %cst_140 {dimension_numbers = #tpu.dot_dimension_numbers<[1], [0], [0], [1], [0, 0, 1, 1], [], []>} : vector<4x4xf32>, vector<4x256xf32>, vector<4x256xf32> -> vector<4x256xf32>
      %201 = arith.addf %190, %200 : vector<4x256xf32>
      %202 = arith.index_cast %arg8 : i32 to index
      %c0_141 = arith.constant 0 : index
      %c0_142 = arith.constant 0 : index
      %203 = vector.load %arg6[%202, %c0_141, %c0_142] : memref<8x4x1xf32, #tpu.memory_space<vmem>>, vector<1x4x1xf32>
      %204 = vector.shape_cast %203 : vector<1x4x1xf32> to vector<4x1xf32>
      %205 = vector.broadcast %204 : vector<4x1xf32> to vector<4x256xf32>
      %206 = arith.addf %201, %205 : vector<4x256xf32>
      %207 = arith.addf %arg9, %206 : vector<4x256xf32>
      scf.yield %207 : vector<4x256xf32>
    }
    %c8_i32_2 = arith.constant 8 : i32
    %c0_3 = arith.constant 0 : index
    %c0_4 = arith.constant 0 : index
    %c0_5 = arith.constant 0 : index
    %4 = vector.load %arg7[%c0_3, %c0_4, %c0_5] : memref<1x4x256xf32, #tpu.memory_space<vmem>>, vector<1x4x256xf32>
    %5 = vector.shape_cast %4 : vector<1x4x256xf32> to vector<4x256xf32>
    %6 = vector.shape_cast %3 : vector<4x256xf32> to vector<1x4x256xf32>
    tpu.vector_store %arg7[%c0_3, %c0_4, %c0_5], %6 {strides = array<i32>} : memref<1x4x256xf32, #tpu.memory_space<vmem>>, vector<1x4x256xf32>,
    return
  }
  func.func @transform_0(%arg0: i32) -> (i32, i32, i32) {
    %c0_i32 = arith.constant 0 : i32
    %c0_i32_0 = arith.constant 0 : i32
    %c0_i32_1 = arith.constant 0 : i32
    %c0_i32_2 = arith.constant 0 : i32
    return %c0_i32, %c0_i32_0, %c0_i32_1 : i32, i32, i32
  }
  func.func @transform_1(%arg0: i32) -> (i32, i32, i32) {
    %c0_i32 = arith.constant 0 : i32
    %c0_i32_0 = arith.constant 0 : i32
    %c0_i32_1 = arith.constant 0 : i32
    return %arg0, %c0_i32, %c0_i32_0 : i32, i32, i32
  }
  func.func @transform_2(%arg0: i32) -> (i32, i32, i32) {
    %c0_i32 = arith.constant 0 : i32
    %c0_i32_0 = arith.constant 0 : i32
    %c0_i32_1 = arith.constant 0 : i32
    %c0_i32_2 = arith.constant 0 : i32
    return %c0_i32, %c0_i32_0, %c0_i32_1 : i32, i32, i32
  }
  func.func @transform_3(%arg0: i32) -> (i32, i32, i32) {
    %c0_i32 = arith.constant 0 : i32
    %c0_i32_0 = arith.constant 0 : i32
    %c0_i32_1 = arith.constant 0 : i32
    %c0_i32_2 = arith.constant 0 : i32
    return %c0_i32, %c0_i32_0, %c0_i32_1 : i32, i32, i32
  }
  func.func @transform_4(%arg0: i32) -> (i32, i32, i32) {
    %c0_i32 = arith.constant 0 : i32
    %c0_i32_0 = arith.constant 0 : i32
    %c0_i32_1 = arith.constant 0 : i32
    %c0_i32_2 = arith.constant 0 : i32
    return %c0_i32, %c0_i32_0, %c0_i32_1 : i32, i32, i32
  }
  func.func @transform_5(%arg0: i32) -> (i32, i32, i32) {
    %c0_i32 = arith.constant 0 : i32
    %c0_i32_0 = arith.constant 0 : i32
    %c0_i32_1 = arith.constant 0 : i32
    %c0_i32_2 = arith.constant 0 : i32
    return %c0_i32, %c0_i32_0, %c0_i32_1 : i32, i32, i32
  }
  func.func @transform_6(%arg0: i32) -> (i32, i32, i32) {
    %c0_i32 = arith.constant 0 : i32
    %c0_i32_0 = arith.constant 0 : i32
    %c0_i32_1 = arith.constant 0 : i32
    return %arg0, %c0_i32, %c0_i32_0 : i32, i32, i32
  }
}

</mosaic_0001>

<llo_original>
// kernel: dblock_forward.1
$region0: #{dblock_forward.1}
  #allocation0 [shape = 'u32[]', space=smem, size = 0x4, offset = 0x4, fixed_abs, tag = 'smem constant byte address 0x4 - core index']
  #allocation1 [shape = 'u32[144,128]{1,0:T(1,128)}', space=vmem, size = 0x12000, scoped, tag = 'internal scratch']
  %s0 = inlined_call_operand.vmem [shape: f32[9,4,256], index: 0, kind: input, shape index: {}]
  %s1 = inlined_call_operand.vmem [shape: f32[2,4,256], index: 1, kind: input, shape index: {}]
  %s2 = inlined_call_operand.vmem [shape: f32[72,4,4], index: 2, kind: input, shape index: {}]
  %s3 = inlined_call_operand.vmem [shape: f32[8,4,1], index: 3, kind: input, shape index: {}]
  %s4 = inlined_call_operand.vmem [shape: f32[72,4,4], index: 4, kind: input, shape index: {}]
  %s5 = inlined_call_operand.vmem [shape: f32[8,4,1], index: 5, kind: input, shape index: {}]
  %s6 = inlined_call_operand.vmem [shape: f32[2,4,256], index: 6, kind: output, shape index: {}]
  %s7 = sld [smem:[#allocation0]]
  $region64: #{dblock_forward.1} parent=0
    _
  %s9 = ssub.s32 1, %s7
  %s10 = scalar_select 0, %s9, %s7
  loop: start=0, step=1, limit=4
  $region2: #{dblock_forward.1} parent=0 // loop_pre_header
    _
  $region3: #{dblock_forward.1} parent=0 // loop_header
    %s12 = sphi 0, %s16
    %p13 = scmp.ge.s32.totalorder %s12, 4
    %s20 = sphi 0, %s20
    %s22 = sphi 0, %s20
    %s23 = sphi 0, %s22
    %s37 = sphi 0, %s23
    %s43 = sphi 0, %s45
    %s46 = sphi 0, %s43
    %s47 = sphi 0, %s46
    %s63 = sphi 0, %s47
    %s67 = sphi 0, %s67
    %s69 = sphi 0, %s67
    %s70 = sphi 0, %s69
    %s84 = sphi 0, %s70
    %s88 = sphi 0, %s88
    %s90 = sphi 0, %s88
    %s91 = sphi 0, %s90
    %s105 = sphi 0, %s91
    %s109 = sphi 0, %s109
    %s111 = sphi 0, %s109
    %s112 = sphi 0, %s111
    %s126 = sphi 0, %s112
    %s130 = sphi 0, %s130
    %s132 = sphi 0, %s130
    %s133 = sphi 0, %s132
    %s147 = sphi 0, %s133
    %s153 = sphi 0, %s155
    %s156 = sphi 0, %s153
    %s157 = sphi 0, %s156
    %s173 = sphi 0, %s157
  $region4: #{dblock_forward.1} parent=0 // loop_header_branch
    %15 = sbr.rel (%p13) target = $region8
  $region5: #{dblock_forward.1} parent=0 // loop_body
    %s17 = ssub.s32 %s12, 1
    %s18 = ssub.s32 %s12, 2
    %s19 = sadd.s32 %s12, 1
    %s21 = sadd.s32 %s20, 1
    %p24 = scmp.eq.s32.totalorder %s12, 1
    %p25 = scmp.ne.s32.totalorder %s20, %s22
    %p26 = scmp.eq.s32.totalorder %s12, 0
    %p27 = por %p25, %p26
    %p28 = scmp.ne.s32.totalorder %s20, %s22
    %p29 = scmp.eq.s32.totalorder %s17, 1
    %p30 = por %p28, %p29
    %p31 = scmp.ne.s32.totalorder %s22, %s23
    %p32 = scmp.eq.s32.totalorder %s17, 0
    %p33 = por %p31, %p32
    %p34 = scmp.ne.s32.totalorder %s22, %s23
    %p35 = scmp.eq.s32.totalorder %s18, 1
    %p36 = por %p34, %p35
    %p38 = scmp.ne.s32.totalorder %s23, %s37
    %p39 = scmp.eq.s32.totalorder %s18, 0
    %p40 = por %p38, %p39
    %s41 = ssub.s32 %s12, %s19
    %p42 = scmp.eq.s32.totalorder %s41, 0
    %s44 = sadd.s32 %s43, 1
    %s45 = scalar_select %p42, %s43, %s44
    %p48 = pneg %p42
    %p49 = scmp.eq.s32.totalorder %s12, 1
    %p50 = por %p48, %p49
    %p51 = scmp.ne.s32.totalorder %s43, %s46
    %p52 = scmp.eq.s32.totalorder %s12, 0
    %p53 = por %p51, %p52
    %p54 = scmp.ne.s32.totalorder %s43, %s46
    %p55 = scmp.eq.s32.totalorder %s17, 1
    %p56 = por %p54, %p55
    %p57 = scmp.ne.s32.totalorder %s46, %s47
    %p58 = scmp.eq.s32.totalorder %s17, 0
    %p59 = por %p57, %p58
    %p60 = scmp.ne.s32.totalorder %s46, %s47
    %p61 = scmp.eq.s32.totalorder %s18, 1
    %p62 = por %p60, %p61
    %p64 = scmp.ne.s32.totalorder %s47, %s63
    %p65 = scmp.eq.s32.totalorder %s18, 0
    %p66 = por %p64, %p65
    %s68 = sadd.s32 %s67, 1
    %p71 = scmp.eq.s32.totalorder %s12, 1
    %p72 = scmp.ne.s32.totalorder %s67, %s69
    %p73 = scmp.eq.s32.totalorder %s12, 0
    %p74 = por %p72, %p73
    %p75 = scmp.ne.s32.totalorder %s67, %s69
    %p76 = scmp.eq.s32.totalorder %s17, 1
    %p77 = por %p75, %p76
    %p78 = scmp.ne.s32.totalorder %s69, %s70
    %p79 = scmp.eq.s32.totalorder %s17, 0
    %p80 = por %p78, %p79
    %p81 = scmp.ne.s32.totalorder %s69, %s70
    %p82 = scmp.eq.s32.totalorder %s18, 1
    %p83 = por %p81, %p82
    %p85 = scmp.ne.s32.totalorder %s70, %s84
    %p86 = scmp.eq.s32.totalorder %s18, 0
    %p87 = por %p85, %p86
    %s89 = sadd.s32 %s88, 1
    %p92 = scmp.eq.s32.totalorder %s12, 1
    %p93 = scmp.ne.s32.totalorder %s88, %s90
    %p94 = scmp.eq.s32.totalorder %s12, 0
    %p95 = por %p93, %p94
    %p96 = scmp.ne.s32.totalorder %s88, %s90
    %p97 = scmp.eq.s32.totalorder %s17, 1
    %p98 = por %p96, %p97
    %p99 = scmp.ne.s32.totalorder %s90, %s91
    %p100 = scmp.eq.s32.totalorder %s17, 0
    %p101 = por %p99, %p100
    %p102 = scmp.ne.s32.totalorder %s90, %s91
    %p103 = scmp.eq.s32.totalorder %s18, 1
    %p104 = por %p102, %p103
    %p106 = scmp.ne.s32.totalorder %s91, %s105
    %p107 = scmp.eq.s32.totalorder %s18, 0
    %p108 = por %p106, %p107
    %s110 = sadd.s32 %s109, 1
    %p113 = scmp.eq.s32.totalorder %s12, 1
    %p114 = scmp.ne.s32.totalorder %s109, %s111
    %p115 = scmp.eq.s32.totalorder %s12, 0
    %p116 = por %p114, %p115
    %p117 = scmp.ne.s32.totalorder %s109, %s111
    %p118 = scmp.eq.s32.totalorder %s17, 1
    %p119 = por %p117, %p118
    %p120 = scmp.ne.s32.totalorder %s111, %s112
    %p121 = scmp.eq.s32.totalorder %s17, 0
    %p122 = por %p120, %p121
    %p123 = scmp.ne.s32.totalorder %s111, %s112
    %p124 = scmp.eq.s32.totalorder %s18, 1
    %p125 = por %p123, %p124
    %p127 = scmp.ne.s32.totalorder %s112, %s126
    %p128 = scmp.eq.s32.totalorder %s18, 0
    %p129 = por %p127, %p128
    %s131 = sadd.s32 %s130, 1
    %p134 = scmp.eq.s32.totalorder %s12, 1
    %p135 = scmp.ne.s32.totalorder %s130, %s132
    %p136 = scmp.eq.s32.totalorder %s12, 0
    %p137 = por %p135, %p136
    %p138 = scmp.ne.s32.totalorder %s130, %s132
    %p139 = scmp.eq.s32.totalorder %s17, 1
    %p140 = por %p138, %p139
    %p141 = scmp.ne.s32.totalorder %s132, %s133
    %p142 = scmp.eq.s32.totalorder %s17, 0
    %p143 = por %p141, %p142
    %p144 = scmp.ne.s32.totalorder %s132, %s133
    %p145 = scmp.eq.s32.totalorder %s18, 1
    %p146 = por %p144, %p145
    %p148 = scmp.ne.s32.totalorder %s133, %s147
    %p149 = scmp.eq.s32.totalorder %s18, 0
    %p150 = por %p148, %p149
    %s151 = ssub.s32 %s12, %s19
    %p152 = scmp.eq.s32.totalorder %s151, 0
    %s154 = sadd.s32 %s153, 1
    %s155 = scalar_select %p152, %s153, %s154
    %p158 = pneg %p152
    %p159 = scmp.eq.s32.totalorder %s12, 1
    %p160 = por %p158, %p159
    %p161 = scmp.ne.s32.totalorder %s153, %s156
    %p162 = scmp.eq.s32.totalorder %s12, 0
    %p163 = por %p161, %p162
    %p164 = scmp.ne.s32.totalorder %s153, %s156
    %p165 = scmp.eq.s32.totalorder %s17, 1
    %p166 = por %p164, %p165
    %p167 = scmp.ne.s32.totalorder %s156, %s157
    %p168 = scmp.eq.s32.totalorder %s17, 0
    %p169 = por %p167, %p168
    %p170 = scmp.ne.s32.totalorder %s156, %s157
    %p171 = scmp.eq.s32.totalorder %s18, 1
    %p172 = por %p170, %p171
    %p174 = scmp.ne.s32.totalorder %s157, %s173
    %p175 = scmp.eq.s32.totalorder %s18, 0
    %p176 = por %p174, %p175
    %p177 = scmp.le.s32.totalorder 1, %s12
    %p178 = scmp.lt.s32.totalorder %s12, 3
    %p179 = pnand %p177, %p178
    %p180 = pneg %p179
    // Predicated region
    $region9: #{dblock_forward.1} parent=5 // pred_check
      _
    $region10: #{dblock_forward.1} parent=5 // pred_check_branch
      %182 = sbr.rel (%p179) target = $region12
    $region11: #{dblock_forward.1} parent=5 // pred_region
      %s183 = ssub.s32 %s12, 1
      // Predicated region
      $region13: #{dblock_forward.1} parent=11 // pred_check
        %p184 = pneg %p33
      $region14: #{dblock_forward.1} parent=11 // pred_check_branch
        %186 = sbr.rel (%p184) target = $region16
      $region15: #{dblock_forward.1} parent=11 // pred_region
        _
      $region16: #{dblock_forward.1} parent=11 // pred_fallthru
        _
      // Predicated region
      $region17: #{dblock_forward.1} parent=11 // pred_check
        %p187 = pneg %p80
      $region18: #{dblock_forward.1} parent=11 // pred_check_branch
        %189 = sbr.rel (%p187) target = $region20
      $region19: #{dblock_forward.1} parent=11 // pred_region
        _
      $region20: #{dblock_forward.1} parent=11 // pred_fallthru
        _
      // Predicated region
      $region21: #{dblock_forward.1} parent=11 // pred_check
        %p190 = pneg %p101
      $region22: #{dblock_forward.1} parent=11 // pred_check_branch
        %192 = sbr.rel (%p190) target = $region24
      $region23: #{dblock_forward.1} parent=11 // pred_region
        _
      $region24: #{dblock_forward.1} parent=11 // pred_fallthru
        _
      // Predicated region
      $region25: #{dblock_forward.1} parent=11 // pred_check
        %p193 = pneg %p122
      $region26: #{dblock_forward.1} parent=11 // pred_check_branch
        %195 = sbr.rel (%p193) target = $region28
      $region27: #{dblock_forward.1} parent=11 // pred_region
        _
      $region28: #{dblock_forward.1} parent=11 // pred_fallthru
        _
      // Predicated region
      $region29: #{dblock_forward.1} parent=11 // pred_check
        %p196 = pneg %p143
      $region30: #{dblock_forward.1} parent=11 // pred_check_branch
        %198 = sbr.rel (%p196) target = $region32
      $region31: #{dblock_forward.1} parent=11 // pred_region
        _
      $region32: #{dblock_forward.1} parent=11 // pred_fallthru
        _
    $region12: #{dblock_forward.1} parent=5 // pred_fallthru
      _
    %p199 = scmp.lt.s32.totalorder %s12, 2
    // Predicated region
    $region33: #{dblock_forward.1} parent=5 // pred_check
      %p200 = pneg %p199
    $region34: #{dblock_forward.1} parent=5 // pred_check_branch
      %202 = sbr.rel (%p200) target = $region36
    $region35: #{dblock_forward.1} parent=5 // pred_region
      // Predicated region
      $region37: #{dblock_forward.1} parent=35 // pred_check
        %p203 = pneg %p53
      $region38: #{dblock_forward.1} parent=35 // pred_check_branch
        %205 = sbr.rel (%p203) target = $region40
      $region39: #{dblock_forward.1} parent=35 // pred_region
        %p206 = scmp.lt.s32.totalorder %s12, 1
        %s207 = scalar_select %p206, %s12, 1
        %s208 = smul.addr %s207, 2
        %s209 = smul.addr %s208, 4
        %s210 = scalar_lea.vmem %s1, %s209
      $region40: #{dblock_forward.1} parent=35 // pred_fallthru
        _
    $region36: #{dblock_forward.1} parent=5 // pred_fallthru
      _
    %p211 = scmp.le.s32.totalorder 1, %s12
    %p212 = scmp.lt.s32.totalorder %s12, 3
    %p213 = pnand %p211, %p212
    %p214 = pneg %p213
    // Predicated region
    $region41: #{dblock_forward.1} parent=5 // pred_check
      _
    $region42: #{dblock_forward.1} parent=5 // pred_check_branch
      %216 = sbr.rel (%p213) target = $region44
    $region43: #{dblock_forward.1} parent=5 // pred_region
      %s217 = ssub.s32 %s12, 1
      %p218 = pneg %p33
      %p219 = pneg %p30
      %p220 = scmp.lt.s32.totalorder %s17, 1
      %s221 = scalar_select %p220, %s17, 1
      %s222 = smul.addr %s221, 2
      %s223 = smul.addr %s222, 4
      %s224 = scalar_lea.vmem %s1, %s223
      %p225 = pneg %p59
      %p226 = pneg %p56
      %p227 = pneg %p80
      %p228 = pneg %p77
      %p229 = pneg %p101
      %p230 = pneg %p98
      %p231 = pneg %p122
      %p232 = pneg %p119
      %p233 = pneg %p143
      %p234 = pneg %p140
      %p235 = pneg %p169
      %p236 = pneg %p166
      %p237 = scmp.lt.s32.totalorder %s17, 1
      %s238 = scalar_select %p237, %s17, 1
      %s239 = smul.addr %s238, 2
      %s240 = smul.addr %s239, 4
      %s241 = scalar_lea.vmem %s6, %s240
      %p242 = scmp.lt.s32.totalorder %s17, 1
      %s243 = scalar_select %p242, %s17, 1
      %s244 = smul.addr %s243, 2
      %s245 = smul.addr %s244, 4
      %s246 = scalar_lea.vmem %s1, %s245
      %p247 = scmp.lt.s32.totalorder %s17, 1
      %s248 = scalar_select %p247, %s17, 1
      %s249 = smul.addr %s248, 2
      %s250 = smul.addr %s249, 4
      %s251 = scalar_lea.vmem %s6, %s250
      %v252 = vld [vmem:[%s246] sm:$0xff]
      loop: start=0, step=1, limit=8
      $region45: #{dblock_forward.1} parent=43 // loop_pre_header
        _
      $region46: #{dblock_forward.1} parent=43 // loop_header
        %s254 = sphi 0, %s258
        %p255 = scmp.ge.s32.totalorder %s254, 8
        %v259 = vphi %v252, %v1987
      $region47: #{dblock_forward.1} parent=43 // loop_header_branch
        %257 = sbr.rel (%p255) target = $region51
      $region48: #{dblock_forward.1} parent=43 // loop_body
        %v261 = vcombine.high %v259, %v259
        %263 = vrot.lane.b32.xlu0 %v259, 17
        %v264 = vpop.permute.xlu0 %263
        %265 = vrot.lane.b32.xlu0 %v261, 17
        %v266 = vpop.permute.xlu0 %265
        %v267 = vlaneseq
        %v268 = vand.u32 %v267, 127
        %vm269 = vcmp.lt.s32.totalorder %v268, 17
        %v270 = vsel %vm269, %v264, %v266
        %v271 = vsel %vm269, %v266, %v264
        %v272 = vld [vmem:[%s0] sm:$0xff]
        %v274 = vcombine.high %v272, %v272
        %v276 = vmul.f32 %v271, %v272
        %v277 = vmul.f32 %v270, %v274
        %s278 = smul.u32 %s254, 9
        %s279 = smul.u32 %s278, 4
        %s280 = scalar_lea.vmem %s2, %s279
        %v281 = vld [vmem:[%s280] sm:$0xf]
        %282 = vrot.lane.b32.xlu0 %v259, 16
        %v283 = vpop.permute.xlu0 %282
        %284 = vrot.lane.b32.xlu0 %v261, 16
        %v285 = vpop.permute.xlu0 %284
        %vm286 = vcmp.lt.s32.totalorder %v268, 16
        %v287 = vsel %vm286, %v283, %v285
        %v288 = vsel %vm286, %v285, %v283
        %s289 = scalar_lea.vmem %s0, 8
        %v290 = vld [vmem:[%s289] sm:$0xff]
        %v292 = vcombine.high %v290, %v290
        %v294 = vmul.f32 %v288, %v290
        %v295 = vmul.f32 %v287, %v292
        %s296 = sadd.s32 %s278, 1
        %s297 = smul.u32 %s296, 4
        %s298 = scalar_lea.vmem %s2, %s297
        %v299 = vld [vmem:[%s298] sm:$0xf]
        %vm300 = vcmask 31744
        %v302 = vsel %vm300, %v299, 0
        %vm304 = vcmask 1043456
        %v306 = vsel %vm304, %v294, 0
        %v309 = vsel %vm304, %v295, 0
        %311 = vmatprep.subr.mxu0 %v309
        %312 = vmatpush1.msra.mxu0 %v306
        %313 = vmatprep.subr.mxu0 0.0
        %314 = vmatpush1.msra.mxu0 0.0
        %315 = vmatprep.subr.mxu0 0.0
        %316 = vmatpush1.msra.mxu0 0.0
        %317 = vmatprep.subr.mxu0 0.0
        %318 = vmatpush1.msra.mxu0 0.0
        %319 = vmatprep.subr.mxu0 0.0
        %320 = vmatpush1.msra.mxu0 0.0
        %321 = vmatprep.subr.mxu0 0.0
        %322 = vmatpush1.msra.mxu0 0.0
        %323 = vmatprep.subr.mxu0 0.0
        %324 = vmatpush1.msra.mxu0 0.0
        %325 = vmatprep.subr.mxu0 0.0
        %326 = vmatpush1.msra.mxu0 0.0
        %327 = vmatprep.subr.mxu0 0.0
        %328 = vmatpush1.msra.mxu0 0.0
        %329 = vmatprep.subr.mxu0 0.0
        %330 = vmatpush1.msra.mxu0 0.0
        %331 = vmatprep.subr.mxu0 0.0
        %332 = vmatpush1.msra.mxu0 0.0
        %333 = vmatprep.subr.mxu0 0.0
        %334 = vmatpush1.msra.mxu0 0.0
        %335 = vmatprep.subr.mxu0 0.0
        %336 = vmatpush1.msra.mxu0 0.0
        %337 = vmatprep.subr.mxu0 0.0
        %338 = vmatpush1.msra.mxu0 0.0
        %339 = vmatprep.subr.mxu0 0.0
        %340 = vmatpush1.msra.mxu0 0.0
        %341 = vmatprep.subr.mxu0 0.0
        %342 = vmatpush1.msra.mxu0 0.0
        %343 = vmatprep.subr.mxu0 0.0
        %344 = vmatpush1.msra.mxu0 0.0
        %345 = vmatprep.subr.mxu0 0.0
        %346 = vmatpush1.msra.mxu0 0.0
        %347 = vmatprep.subr.mxu0 0.0
        %348 = vmatpush1.msra.mxu0 0.0
        %349 = vmatprep.subr.mxu0 0.0
        %350 = vmatpush1.msra.mxu0 0.0
        %351 = vmatprep.subr.mxu0 0.0
        %352 = vmatpush1.msra.mxu0 0.0
        %353 = vmatprep.subr.mxu0 0.0
        %354 = vmatpush1.msra.mxu0 0.0
        %355 = vmatprep.subr.mxu0 0.0
        %356 = vmatpush1.msra.mxu0 0.0
        %357 = vmatprep.subr.mxu0 0.0
        %358 = vmatpush1.msra.mxu0 0.0
        %359 = vmatprep.subr.mxu0 0.0
        %360 = vmatpush1.msra.mxu0 0.0
        %361 = vmatprep.subr.mxu0 0.0
        %362 = vmatpush1.msra.mxu0 0.0
        %363 = vmatprep.subr.mxu0 0.0
        %364 = vmatpush1.msra.mxu0 0.0
        %365 = vmatprep.subr.mxu0 0.0
        %366 = vmatpush1.msra.mxu0 0.0
        %367 = vmatprep.subr.mxu0 0.0
        %368 = vmatpush1.msra.mxu0 0.0
        %369 = vmatprep.subr.mxu0 0.0
        %370 = vmatpush1.msra.mxu0 0.0
        %371 = vmatprep.subr.mxu0 0.0
        %372 = vmatpush1.msra.mxu0 0.0
        %373 = vmatprep.subr.mxu0 0.0
        %374 = vmatpush1.msra.mxu0 0.0
        %375 = vmatprep.mubr.f32.mxu0 0.0
        %376 = vmatmul.mubr.f32.gmra.mrb[0].mxu0 %v302
        %v377 = vpop.f32.mrb[0].mxu0
        %v378 = vadd.f32 0.0, %v377
        %v379 = vpop.f32.mrb[0].mxu0
        %v380 = vadd.f32 0.0, %v379
        %381 = vdwg.mxu0
        %v383 = vsel %vm300, %v281, 0
        %v386 = vsel %vm304, %v276, 0
        %v389 = vsel %vm304, %v277, 0
        %391 = vmatprep.subr.mxu0 %v389
        %392 = vmatpush1.msra.mxu0 %v386
        %393 = vmatprep.subr.mxu0 0.0
        %394 = vmatpush1.msra.mxu0 0.0
        %395 = vmatprep.subr.mxu0 0.0
        %396 = vmatpush1.msra.mxu0 0.0
        %397 = vmatprep.subr.mxu0 0.0
        %398 = vmatpush1.msra.mxu0 0.0
        %399 = vmatprep.subr.mxu0 0.0
        %400 = vmatpush1.msra.mxu0 0.0
        %401 = vmatprep.subr.mxu0 0.0
        %402 = vmatpush1.msra.mxu0 0.0
        %403 = vmatprep.subr.mxu0 0.0
        %404 = vmatpush1.msra.mxu0 0.0
        %405 = vmatprep.subr.mxu0 0.0
        %406 = vmatpush1.msra.mxu0 0.0
        %407 = vmatprep.subr.mxu0 0.0
        %408 = vmatpush1.msra.mxu0 0.0
        %409 = vmatprep.subr.mxu0 0.0
        %410 = vmatpush1.msra.mxu0 0.0
        %411 = vmatprep.subr.mxu0 0.0
        %412 = vmatpush1.msra.mxu0 0.0
        %413 = vmatprep.subr.mxu0 0.0
        %414 = vmatpush1.msra.mxu0 0.0
        %415 = vmatprep.subr.mxu0 0.0
        %416 = vmatpush1.msra.mxu0 0.0
        %417 = vmatprep.subr.mxu0 0.0
        %418 = vmatpush1.msra.mxu0 0.0
        %419 = vmatprep.subr.mxu0 0.0
        %420 = vmatpush1.msra.mxu0 0.0
        %421 = vmatprep.subr.mxu0 0.0
        %422 = vmatpush1.msra.mxu0 0.0
        %423 = vmatprep.subr.mxu0 0.0
        %424 = vmatpush1.msra.mxu0 0.0
        %425 = vmatprep.subr.mxu0 0.0
        %426 = vmatpush1.msra.mxu0 0.0
        %427 = vmatprep.subr.mxu0 0.0
        %428 = vmatpush1.msra.mxu0 0.0
        %429 = vmatprep.subr.mxu0 0.0
        %430 = vmatpush1.msra.mxu0 0.0
        %431 = vmatprep.subr.mxu0 0.0
        %432 = vmatpush1.msra.mxu0 0.0
        %433 = vmatprep.subr.mxu0 0.0
        %434 = vmatpush1.msra.mxu0 0.0
        %435 = vmatprep.subr.mxu0 0.0
        %436 = vmatpush1.msra.mxu0 0.0
        %437 = vmatprep.subr.mxu0 0.0
        %438 = vmatpush1.msra.mxu0 0.0
        %439 = vmatprep.subr.mxu0 0.0
        %440 = vmatpush1.msra.mxu0 0.0
        %441 = vmatprep.subr.mxu0 0.0
        %442 = vmatpush1.msra.mxu0 0.0
        %443 = vmatprep.subr.mxu0 0.0
        %444 = vmatpush1.msra.mxu0 0.0
        %445 = vmatprep.subr.mxu0 0.0
        %446 = vmatpush1.msra.mxu0 0.0
        %447 = vmatprep.subr.mxu0 0.0
        %448 = vmatpush1.msra.mxu0 0.0
        %449 = vmatprep.subr.mxu0 0.0
        %450 = vmatpush1.msra.mxu0 0.0
        %451 = vmatprep.subr.mxu0 0.0
        %452 = vmatpush1.msra.mxu0 0.0
        %453 = vmatprep.subr.mxu0 0.0
        %454 = vmatpush1.msra.mxu0 0.0
        %455 = vmatprep.mubr.f32.mxu0 0.0
        %456 = vmatmul.mubr.f32.gmra.mrb[0].mxu0 %v383
        %v457 = vpop.f32.mrb[0].mxu0
        %v458 = vadd.f32 %v378, %v457
        %v459 = vpop.f32.mrb[0].mxu0
        %v460 = vadd.f32 %v380, %v459
        %461 = vdwg.mxu0
        %462 = vrot.lane.b32.xlu0 %v259, 15
        %v463 = vpop.permute.xlu0 %462
        %464 = vrot.lane.b32.xlu0 %v261, 15
        %v465 = vpop.permute.xlu0 %464
        %vm466 = vcmp.lt.s32.totalorder %v268, 15
        %v467 = vsel %vm466, %v463, %v465
        %v468 = vsel %vm466, %v465, %v463
        %s469 = scalar_lea.vmem %s0, 16
        %v470 = vld [vmem:[%s469] sm:$0xff]
        %v472 = vcombine.high %v470, %v470
        %v474 = vmul.f32 %v468, %v470
        %v475 = vmul.f32 %v467, %v472
        %s476 = sadd.s32 %s278, 2
        %s477 = smul.u32 %s476, 4
        %s478 = scalar_lea.vmem %s2, %s477
        %v479 = vld [vmem:[%s478] sm:$0xf]
        %v481 = vsel %vm300, %v479, 0
        %v484 = vsel %vm304, %v474, 0
        %v487 = vsel %vm304, %v475, 0
        %489 = vmatprep.subr.mxu0 %v487
        %490 = vmatpush1.msra.mxu0 %v484
        %491 = vmatprep.subr.mxu0 0.0
        %492 = vmatpush1.msra.mxu0 0.0
        %493 = vmatprep.subr.mxu0 0.0
        %494 = vmatpush1.msra.mxu0 0.0
        %495 = vmatprep.subr.mxu0 0.0
        %496 = vmatpush1.msra.mxu0 0.0
        %497 = vmatprep.subr.mxu0 0.0
        %498 = vmatpush1.msra.mxu0 0.0
        %499 = vmatprep.subr.mxu0 0.0
        %500 = vmatpush1.msra.mxu0 0.0
        %501 = vmatprep.subr.mxu0 0.0
        %502 = vmatpush1.msra.mxu0 0.0
        %503 = vmatprep.subr.mxu0 0.0
        %504 = vmatpush1.msra.mxu0 0.0
        %505 = vmatprep.subr.mxu0 0.0
        %506 = vmatpush1.msra.mxu0 0.0
        %507 = vmatprep.subr.mxu0 0.0
        %508 = vmatpush1.msra.mxu0 0.0
        %509 = vmatprep.subr.mxu0 0.0
        %510 = vmatpush1.msra.mxu0 0.0
        %511 = vmatprep.subr.mxu0 0.0
        %512 = vmatpush1.msra.mxu0 0.0
        %513 = vmatprep.subr.mxu0 0.0
        %514 = vmatpush1.msra.mxu0 0.0
        %515 = vmatprep.subr.mxu0 0.0
        %516 = vmatpush1.msra.mxu0 0.0
        %517 = vmatprep.subr.mxu0 0.0
        %518 = vmatpush1.msra.mxu0 0.0
        %519 = vmatprep.subr.mxu0 0.0
        %520 = vmatpush1.msra.mxu0 0.0
        %521 = vmatprep.subr.mxu0 0.0
        %522 = vmatpush1.msra.mxu0 0.0
        %523 = vmatprep.subr.mxu0 0.0
        %524 = vmatpush1.msra.mxu0 0.0
        %525 = vmatprep.subr.mxu0 0.0
        %526 = vmatpush1.msra.mxu0 0.0
        %527 = vmatprep.subr.mxu0 0.0
        %528 = vmatpush1.msra.mxu0 0.0
        %529 = vmatprep.subr.mxu0 0.0
        %530 = vmatpush1.msra.mxu0 0.0
        %531 = vmatprep.subr.mxu0 0.0
        %532 = vmatpush1.msra.mxu0 0.0
        %533 = vmatprep.subr.mxu0 0.0
        %534 = vmatpush1.msra.mxu0 0.0
        %535 = vmatprep.subr.mxu0 0.0
        %536 = vmatpush1.msra.mxu0 0.0
        %537 = vmatprep.subr.mxu0 0.0
        %538 = vmatpush1.msra.mxu0 0.0
        %539 = vmatprep.subr.mxu0 0.0
        %540 = vmatpush1.msra.mxu0 0.0
        %541 = vmatprep.subr.mxu0 0.0
        %542 = vmatpush1.msra.mxu0 0.0
        %543 = vmatprep.subr.mxu0 0.0
        %544 = vmatpush1.msra.mxu0 0.0
        %545 = vmatprep.subr.mxu0 0.0
        %546 = vmatpush1.msra.mxu0 0.0
        %547 = vmatprep.subr.mxu0 0.0
        %548 = vmatpush1.msra.mxu0 0.0
        %549 = vmatprep.subr.mxu0 0.0
        %550 = vmatpush1.msra.mxu0 0.0
        %551 = vmatprep.subr.mxu0 0.0
        %552 = vmatpush1.msra.mxu0 0.0
        %553 = vmatprep.mubr.f32.mxu0 0.0
        %554 = vmatmul.mubr.f32.gmra.mrb[0].mxu0 %v481
        %v555 = vpop.f32.mrb[0].mxu0
        %v556 = vadd.f32 0.0, %v555
        %v557 = vpop.f32.mrb[0].mxu0
        %v558 = vadd.f32 0.0, %v557
        %559 = vdwg.mxu0
        %v560 = vadd.f32 %v458, %v556
        %v561 = vadd.f32 %v460, %v558
        %562 = vrot.lane.b32.xlu0 %v259, 1
        %v563 = vpop.permute.xlu0 %562
        %564 = vrot.lane.b32.xlu0 %v261, 1
        %v565 = vpop.permute.xlu0 %564
        %vm566 = vcmp.lt.s32.totalorder %v268, 1
        %v567 = vsel %vm566, %v563, %v565
        %v568 = vsel %vm566, %v565, %v563
        %s569 = scalar_lea.vmem %s0, 24
        %v570 = vld [vmem:[%s569] sm:$0xff]
        %v572 = vcombine.high %v570, %v570
        %v574 = vmul.f32 %v568, %v570
        %v575 = vmul.f32 %v567, %v572
        %s576 = sadd.s32 %s278, 3
        %s577 = smul.u32 %s576, 4
        %s578 = scalar_lea.vmem %s2, %s577
        %v579 = vld [vmem:[%s578] sm:$0xf]
        %v581 = vsel %vm300, %v579, 0
        %v584 = vsel %vm304, %v574, 0
        %v587 = vsel %vm304, %v575, 0
        %589 = vmatprep.subr.mxu0 %v587
        %590 = vmatpush1.msra.mxu0 %v584
        %591 = vmatprep.subr.mxu0 0.0
        %592 = vmatpush1.msra.mxu0 0.0
        %593 = vmatprep.subr.mxu0 0.0
        %594 = vmatpush1.msra.mxu0 0.0
        %595 = vmatprep.subr.mxu0 0.0
        %596 = vmatpush1.msra.mxu0 0.0
        %597 = vmatprep.subr.mxu0 0.0
        %598 = vmatpush1.msra.mxu0 0.0
        %599 = vmatprep.subr.mxu0 0.0
        %600 = vmatpush1.msra.mxu0 0.0
        %601 = vmatprep.subr.mxu0 0.0
        %602 = vmatpush1.msra.mxu0 0.0
        %603 = vmatprep.subr.mxu0 0.0
        %604 = vmatpush1.msra.mxu0 0.0
        %605 = vmatprep.subr.mxu0 0.0
        %606 = vmatpush1.msra.mxu0 0.0
        %607 = vmatprep.subr.mxu0 0.0
        %608 = vmatpush1.msra.mxu0 0.0
        %609 = vmatprep.subr.mxu0 0.0
        %610 = vmatpush1.msra.mxu0 0.0
        %611 = vmatprep.subr.mxu0 0.0
        %612 = vmatpush1.msra.mxu0 0.0
        %613 = vmatprep.subr.mxu0 0.0
        %614 = vmatpush1.msra.mxu0 0.0
        %615 = vmatprep.subr.mxu0 0.0
        %616 = vmatpush1.msra.mxu0 0.0
        %617 = vmatprep.subr.mxu0 0.0
        %618 = vmatpush1.msra.mxu0 0.0
        %619 = vmatprep.subr.mxu0 0.0
        %620 = vmatpush1.msra.mxu0 0.0
        %621 = vmatprep.subr.mxu0 0.0
        %622 = vmatpush1.msra.mxu0 0.0
        %623 = vmatprep.subr.mxu0 0.0
        %624 = vmatpush1.msra.mxu0 0.0
        %625 = vmatprep.subr.mxu0 0.0
        %626 = vmatpush1.msra.mxu0 0.0
        %627 = vmatprep.subr.mxu0 0.0
        %628 = vmatpush1.msra.mxu0 0.0
        %629 = vmatprep.subr.mxu0 0.0
        %630 = vmatpush1.msra.mxu0 0.0
        %631 = vmatprep.subr.mxu0 0.0
        %632 = vmatpush1.msra.mxu0 0.0
        %633 = vmatprep.subr.mxu0 0.0
        %634 = vmatpush1.msra.mxu0 0.0
        %635 = vmatprep.subr.mxu0 0.0
        %636 = vmatpush1.msra.mxu0 0.0
        %637 = vmatprep.subr.mxu0 0.0
        %638 = vmatpush1.msra.mxu0 0.0
        %639 = vmatprep.subr.mxu0 0.0
        %640 = vmatpush1.msra.mxu0 0.0
        %641 = vmatprep.subr.mxu0 0.0
        %642 = vmatpush1.msra.mxu0 0.0
        %643 = vmatprep.subr.mxu0 0.0
        %644 = vmatpush1.msra.mxu0 0.0
        %645 = vmatprep.subr.mxu0 0.0
        %646 = vmatpush1.msra.mxu0 0.0
        %647 = vmatprep.subr.mxu0 0.0
        %648 = vmatpush1.msra.mxu0 0.0
        %649 = vmatprep.subr.mxu0 0.0
        %650 = vmatpush1.msra.mxu0 0.0
        %651 = vmatprep.subr.mxu0 0.0
        %652 = vmatpush1.msra.mxu0 0.0
        %653 = vmatprep.mubr.f32.mxu0 0.0
        %654 = vmatmul.mubr.f32.gmra.mrb[0].mxu0 %v581
        %v655 = vpop.f32.mrb[0].mxu0
        %v656 = vadd.f32 0.0, %v655
        %v657 = vpop.f32.mrb[0].mxu0
        %v658 = vadd.f32 0.0, %v657
        %659 = vdwg.mxu0
        %v660 = vadd.f32 %v560, %v656
        %v661 = vadd.f32 %v561, %v658
        %s662 = sadd.s32 %s278, 4
        %s663 = smul.u32 %s662, 4
        %s664 = scalar_lea.vmem %s2, %s663
        %v665 = vld [vmem:[%s664] sm:$0xf]
        %v667 = vsel %vm300, %v665, 0
        %v669 = vsel %vm304, %v259, 0
        %v671 = vsel %vm304, %v261, 0
        %673 = vmatprep.subr.mxu0 %v671
        %674 = vmatpush1.msra.mxu0 %v669
        %675 = vmatprep.subr.mxu0 0.0
        %676 = vmatpush1.msra.mxu0 0.0
        %677 = vmatprep.subr.mxu0 0.0
        %678 = vmatpush1.msra.mxu0 0.0
        %679 = vmatprep.subr.mxu0 0.0
        %680 = vmatpush1.msra.mxu0 0.0
        %681 = vmatprep.subr.mxu0 0.0
        %682 = vmatpush1.msra.mxu0 0.0
        %683 = vmatprep.subr.mxu0 0.0
        %684 = vmatpush1.msra.mxu0 0.0
        %685 = vmatprep.subr.mxu0 0.0
        %686 = vmatpush1.msra.mxu0 0.0
        %687 = vmatprep.subr.mxu0 0.0
        %688 = vmatpush1.msra.mxu0 0.0
        %689 = vmatprep.subr.mxu0 0.0
        %690 = vmatpush1.msra.mxu0 0.0
        %691 = vmatprep.subr.mxu0 0.0
        %692 = vmatpush1.msra.mxu0 0.0
        %693 = vmatprep.subr.mxu0 0.0
        %694 = vmatpush1.msra.mxu0 0.0
        %695 = vmatprep.subr.mxu0 0.0
        %696 = vmatpush1.msra.mxu0 0.0
        %697 = vmatprep.subr.mxu0 0.0
        %698 = vmatpush1.msra.mxu0 0.0
        %699 = vmatprep.subr.mxu0 0.0
        %700 = vmatpush1.msra.mxu0 0.0
        %701 = vmatprep.subr.mxu0 0.0
        %702 = vmatpush1.msra.mxu0 0.0
        %703 = vmatprep.subr.mxu0 0.0
        %704 = vmatpush1.msra.mxu0 0.0
        %705 = vmatprep.subr.mxu0 0.0
        %706 = vmatpush1.msra.mxu0 0.0
        %707 = vmatprep.subr.mxu0 0.0
        %708 = vmatpush1.msra.mxu0 0.0
        %709 = vmatprep.subr.mxu0 0.0
        %710 = vmatpush1.msra.mxu0 0.0
        %711 = vmatprep.subr.mxu0 0.0
        %712 = vmatpush1.msra.mxu0 0.0
        %713 = vmatprep.subr.mxu0 0.0
        %714 = vmatpush1.msra.mxu0 0.0
        %715 = vmatprep.subr.mxu0 0.0
        %716 = vmatpush1.msra.mxu0 0.0
        %717 = vmatprep.subr.mxu0 0.0
        %718 = vmatpush1.msra.mxu0 0.0
        %719 = vmatprep.subr.mxu0 0.0
        %720 = vmatpush1.msra.mxu0 0.0
        %721 = vmatprep.subr.mxu0 0.0
        %722 = vmatpush1.msra.mxu0 0.0
        %723 = vmatprep.subr.mxu0 0.0
        %724 = vmatpush1.msra.mxu0 0.0
        %725 = vmatprep.subr.mxu0 0.0
        %726 = vmatpush1.msra.mxu0 0.0
        %727 = vmatprep.subr.mxu0 0.0
        %728 = vmatpush1.msra.mxu0 0.0
        %729 = vmatprep.subr.mxu0 0.0
        %730 = vmatpush1.msra.mxu0 0.0
        %731 = vmatprep.subr.mxu0 0.0
        %732 = vmatpush1.msra.mxu0 0.0
        %733 = vmatprep.subr.mxu0 0.0
        %734 = vmatpush1.msra.mxu0 0.0
        %735 = vmatprep.subr.mxu0 0.0
        %736 = vmatpush1.msra.mxu0 0.0
        %737 = vmatprep.mubr.f32.mxu0 0.0
        %738 = vmatmul.mubr.f32.gmra.mrb[0].mxu0 %v667
        %v739 = vpop.f32.mrb[0].mxu0
        %v740 = vadd.f32 0.0, %v739
        %v741 = vpop.f32.mrb[0].mxu0
        %v742 = vadd.f32 0.0, %v741
        %743 = vdwg.mxu0
        %v744 = vadd.f32 %v660, %v740
        %v745 = vadd.f32 %v661, %v742
        %746 = vrot.lane.b32.xlu0 %v259, 127
        %v747 = vpop.permute.xlu0 %746
        %748 = vrot.lane.b32.xlu0 %v261, 127
        %v749 = vpop.permute.xlu0 %748
        %vm750 = vcmp.lt.s32.totalorder %v268, 127
        %v751 = vsel %vm750, %v747, %v749
        %v752 = vsel %vm750, %v749, %v747
        %s753 = scalar_lea.vmem %s0, 40
        %v754 = vld [vmem:[%s753] sm:$0xff]
        %v756 = vcombine.high %v754, %v754
        %v758 = vmul.f32 %v751, %v754
        %v759 = vmul.f32 %v752, %v756
        %s760 = sadd.s32 %s278, 5
        %s761 = smul.u32 %s760, 4
        %s762 = scalar_lea.vmem %s2, %s761
        %v763 = vld [vmem:[%s762] sm:$0xf]
        %v765 = vsel %vm300, %v763, 0
        %v768 = vsel %vm304, %v758, 0
        %v771 = vsel %vm304, %v759, 0
        %773 = vmatprep.subr.mxu0 %v771
        %774 = vmatpush1.msra.mxu0 %v768
        %775 = vmatprep.subr.mxu0 0.0
        %776 = vmatpush1.msra.mxu0 0.0
        %777 = vmatprep.subr.mxu0 0.0
        %778 = vmatpush1.msra.mxu0 0.0
        %779 = vmatprep.subr.mxu0 0.0
        %780 = vmatpush1.msra.mxu0 0.0
        %781 = vmatprep.subr.mxu0 0.0
        %782 = vmatpush1.msra.mxu0 0.0
        %783 = vmatprep.subr.mxu0 0.0
        %784 = vmatpush1.msra.mxu0 0.0
        %785 = vmatprep.subr.mxu0 0.0
        %786 = vmatpush1.msra.mxu0 0.0
        %787 = vmatprep.subr.mxu0 0.0
        %788 = vmatpush1.msra.mxu0 0.0
        %789 = vmatprep.subr.mxu0 0.0
        %790 = vmatpush1.msra.mxu0 0.0
        %791 = vmatprep.subr.mxu0 0.0
        %792 = vmatpush1.msra.mxu0 0.0
        %793 = vmatprep.subr.mxu0 0.0
        %794 = vmatpush1.msra.mxu0 0.0
        %795 = vmatprep.subr.mxu0 0.0
        %796 = vmatpush1.msra.mxu0 0.0
        %797 = vmatprep.subr.mxu0 0.0
        %798 = vmatpush1.msra.mxu0 0.0
        %799 = vmatprep.subr.mxu0 0.0
        %800 = vmatpush1.msra.mxu0 0.0
        %801 = vmatprep.subr.mxu0 0.0
        %802 = vmatpush1.msra.mxu0 0.0
        %803 = vmatprep.subr.mxu0 0.0
        %804 = vmatpush1.msra.mxu0 0.0
        %805 = vmatprep.subr.mxu0 0.0
        %806 = vmatpush1.msra.mxu0 0.0
        %807 = vmatprep.subr.mxu0 0.0
        %808 = vmatpush1.msra.mxu0 0.0
        %809 = vmatprep.subr.mxu0 0.0
        %810 = vmatpush1.msra.mxu0 0.0
        %811 = vmatprep.subr.mxu0 0.0
        %812 = vmatpush1.msra.mxu0 0.0
        %813 = vmatprep.subr.mxu0 0.0
        %814 = vmatpush1.msra.mxu0 0.0
        %815 = vmatprep.subr.mxu0 0.0
        %816 = vmatpush1.msra.mxu0 0.0
        %817 = vmatprep.subr.mxu0 0.0
        %818 = vmatpush1.msra.mxu0 0.0
        %819 = vmatprep.subr.mxu0 0.0
        %820 = vmatpush1.msra.mxu0 0.0
        %821 = vmatprep.subr.mxu0 0.0
        %822 = vmatpush1.msra.mxu0 0.0
        %823 = vmatprep.subr.mxu0 0.0
        %824 = vmatpush1.msra.mxu0 0.0
        %825 = vmatprep.subr.mxu0 0.0
        %826 = vmatpush1.msra.mxu0 0.0
        %827 = vmatprep.subr.mxu0 0.0
        %828 = vmatpush1.msra.mxu0 0.0
        %829 = vmatprep.subr.mxu0 0.0
        %830 = vmatpush1.msra.mxu0 0.0
        %831 = vmatprep.subr.mxu0 0.0
        %832 = vmatpush1.msra.mxu0 0.0
        %833 = vmatprep.subr.mxu0 0.0
        %834 = vmatpush1.msra.mxu0 0.0
        %835 = vmatprep.subr.mxu0 0.0
        %836 = vmatpush1.msra.mxu0 0.0
        %837 = vmatprep.mubr.f32.mxu0 0.0
        %838 = vmatmul.mubr.f32.gmra.mrb[0].mxu0 %v765
        %v839 = vpop.f32.mrb[0].mxu0
        %v840 = vadd.f32 0.0, %v839
        %v841 = vpop.f32.mrb[0].mxu0
        %v842 = vadd.f32 0.0, %v841
        %843 = vdwg.mxu0
        %v844 = vadd.f32 %v744, %v840
        %v845 = vadd.f32 %v745, %v842
        %846 = vrot.lane.b32.xlu0 %v259, 113
        %v847 = vpop.permute.xlu0 %846
        %848 = vrot.lane.b32.xlu0 %v261, 113
        %v849 = vpop.permute.xlu0 %848
        %vm850 = vcmp.lt.s32.totalorder %v268, 113
        %v851 = vsel %vm850, %v847, %v849
        %v852 = vsel %vm850, %v849, %v847
        %s853 = scalar_lea.vmem %s0, 48
        %v854 = vld [vmem:[%s853] sm:$0xff]
        %v856 = vcombine.high %v854, %v854
        %v858 = vmul.f32 %v851, %v854
        %v859 = vmul.f32 %v852, %v856
        %s860 = sadd.s32 %s278, 6
        %s861 = smul.u32 %s860, 4
        %s862 = scalar_lea.vmem %s2, %s861
        %v863 = vld [vmem:[%s862] sm:$0xf]
        %v865 = vsel %vm300, %v863, 0
        %v868 = vsel %vm304, %v858, 0
        %v871 = vsel %vm304, %v859, 0
        %873 = vmatprep.subr.mxu0 %v871
        %874 = vmatpush1.msra.mxu0 %v868
        %875 = vmatprep.subr.mxu0 0.0
        %876 = vmatpush1.msra.mxu0 0.0
        %877 = vmatprep.subr.mxu0 0.0
        %878 = vmatpush1.msra.mxu0 0.0
        %879 = vmatprep.subr.mxu0 0.0
        %880 = vmatpush1.msra.mxu0 0.0
        %881 = vmatprep.subr.mxu0 0.0
        %882 = vmatpush1.msra.mxu0 0.0
        %883 = vmatprep.subr.mxu0 0.0
        %884 = vmatpush1.msra.mxu0 0.0
        %885 = vmatprep.subr.mxu0 0.0
        %886 = vmatpush1.msra.mxu0 0.0
        %887 = vmatprep.subr.mxu0 0.0
        %888 = vmatpush1.msra.mxu0 0.0
        %889 = vmatprep.subr.mxu0 0.0
        %890 = vmatpush1.msra.mxu0 0.0
        %891 = vmatprep.subr.mxu0 0.0
        %892 = vmatpush1.msra.mxu0 0.0
        %893 = vmatprep.subr.mxu0 0.0
        %894 = vmatpush1.msra.mxu0 0.0
        %895 = vmatprep.subr.mxu0 0.0
        %896 = vmatpush1.msra.mxu0 0.0
        %897 = vmatprep.subr.mxu0 0.0
        %898 = vmatpush1.msra.mxu0 0.0
        %899 = vmatprep.subr.mxu0 0.0
        %900 = vmatpush1.msra.mxu0 0.0
        %901 = vmatprep.subr.mxu0 0.0
        %902 = vmatpush1.msra.mxu0 0.0
        %903 = vmatprep.subr.mxu0 0.0
        %904 = vmatpush1.msra.mxu0 0.0
        %905 = vmatprep.subr.mxu0 0.0
        %906 = vmatpush1.msra.mxu0 0.0
        %907 = vmatprep.subr.mxu0 0.0
        %908 = vmatpush1.msra.mxu0 0.0
        %909 = vmatprep.subr.mxu0 0.0
        %910 = vmatpush1.msra.mxu0 0.0
        %911 = vmatprep.subr.mxu0 0.0
        %912 = vmatpush1.msra.mxu0 0.0
        %913 = vmatprep.subr.mxu0 0.0
        %914 = vmatpush1.msra.mxu0 0.0
        %915 = vmatprep.subr.mxu0 0.0
        %916 = vmatpush1.msra.mxu0 0.0
        %917 = vmatprep.subr.mxu0 0.0
        %918 = vmatpush1.msra.mxu0 0.0
        %919 = vmatprep.subr.mxu0 0.0
        %920 = vmatpush1.msra.mxu0 0.0
        %921 = vmatprep.subr.mxu0 0.0
        %922 = vmatpush1.msra.mxu0 0.0
        %923 = vmatprep.subr.mxu0 0.0
        %924 = vmatpush1.msra.mxu0 0.0
        %925 = vmatprep.subr.mxu0 0.0
        %926 = vmatpush1.msra.mxu0 0.0
        %927 = vmatprep.subr.mxu0 0.0
        %928 = vmatpush1.msra.mxu0 0.0
        %929 = vmatprep.subr.mxu0 0.0
        %930 = vmatpush1.msra.mxu0 0.0
        %931 = vmatprep.subr.mxu0 0.0
        %932 = vmatpush1.msra.mxu0 0.0
        %933 = vmatprep.subr.mxu0 0.0
        %934 = vmatpush1.msra.mxu0 0.0
        %935 = vmatprep.subr.mxu0 0.0
        %936 = vmatpush1.msra.mxu0 0.0
        %937 = vmatprep.mubr.f32.mxu0 0.0
        %938 = vmatmul.mubr.f32.gmra.mrb[0].mxu0 %v865
        %v939 = vpop.f32.mrb[0].mxu0
        %v940 = vadd.f32 0.0, %v939
        %v941 = vpop.f32.mrb[0].mxu0
        %v942 = vadd.f32 0.0, %v941
        %943 = vdwg.mxu0
        %v944 = vadd.f32 %v844, %v940
        %v945 = vadd.f32 %v845, %v942
        %946 = vrot.lane.b32.xlu0 %v259, 112
        %v947 = vpop.permute.xlu0 %946
        %948 = vrot.lane.b32.xlu0 %v261, 112
        %v949 = vpop.permute.xlu0 %948
        %vm950 = vcmp.lt.s32.totalorder %v268, 112
        %v951 = vsel %vm950, %v947, %v949
        %v952 = vsel %vm950, %v949, %v947
        %s953 = scalar_lea.vmem %s0, 56
        %v954 = vld [vmem:[%s953] sm:$0xff]
        %v956 = vcombine.high %v954, %v954
        %v958 = vmul.f32 %v951, %v954
        %v959 = vmul.f32 %v952, %v956
        %s960 = sadd.s32 %s278, 7
        %s961 = smul.u32 %s960, 4
        %s962 = scalar_lea.vmem %s2, %s961
        %v963 = vld [vmem:[%s962] sm:$0xf]
        %v965 = vsel %vm300, %v963, 0
        %v968 = vsel %vm304, %v958, 0
        %v971 = vsel %vm304, %v959, 0
        %973 = vmatprep.subr.mxu0 %v971
        %974 = vmatpush1.msra.mxu0 %v968
        %975 = vmatprep.subr.mxu0 0.0
        %976 = vmatpush1.msra.mxu0 0.0
        %977 = vmatprep.subr.mxu0 0.0
        %978 = vmatpush1.msra.mxu0 0.0
        %979 = vmatprep.subr.mxu0 0.0
        %980 = vmatpush1.msra.mxu0 0.0
        %981 = vmatprep.subr.mxu0 0.0
        %982 = vmatpush1.msra.mxu0 0.0
        %983 = vmatprep.subr.mxu0 0.0
        %984 = vmatpush1.msra.mxu0 0.0
        %985 = vmatprep.subr.mxu0 0.0
        %986 = vmatpush1.msra.mxu0 0.0
        %987 = vmatprep.subr.mxu0 0.0
        %988 = vmatpush1.msra.mxu0 0.0
        %989 = vmatprep.subr.mxu0 0.0
        %990 = vmatpush1.msra.mxu0 0.0
        %991 = vmatprep.subr.mxu0 0.0
        %992 = vmatpush1.msra.mxu0 0.0
        %993 = vmatprep.subr.mxu0 0.0
        %994 = vmatpush1.msra.mxu0 0.0
        %995 = vmatprep.subr.mxu0 0.0
        %996 = vmatpush1.msra.mxu0 0.0
        %997 = vmatprep.subr.mxu0 0.0
        %998 = vmatpush1.msra.mxu0 0.0
        %999 = vmatprep.subr.mxu0 0.0
        %1000 = vmatpush1.msra.mxu0 0.0
        %1001 = vmatprep.subr.mxu0 0.0
        %1002 = vmatpush1.msra.mxu0 0.0
        %1003 = vmatprep.subr.mxu0 0.0
        %1004 = vmatpush1.msra.mxu0 0.0
        %1005 = vmatprep.subr.mxu0 0.0
        %1006 = vmatpush1.msra.mxu0 0.0
        %1007 = vmatprep.subr.mxu0 0.0
        %1008 = vmatpush1.msra.mxu0 0.0
        %1009 = vmatprep.subr.mxu0 0.0
        %1010 = vmatpush1.msra.mxu0 0.0
        %1011 = vmatprep.subr.mxu0 0.0
        %1012 = vmatpush1.msra.mxu0 0.0
        %1013 = vmatprep.subr.mxu0 0.0
        %1014 = vmatpush1.msra.mxu0 0.0
        %1015 = vmatprep.subr.mxu0 0.0
        %1016 = vmatpush1.msra.mxu0 0.0
        %1017 = vmatprep.subr.mxu0 0.0
        %1018 = vmatpush1.msra.mxu0 0.0
        %1019 = vmatprep.subr.mxu0 0.0
        %1020 = vmatpush1.msra.mxu0 0.0
        %1021 = vmatprep.subr.mxu0 0.0
        %1022 = vmatpush1.msra.mxu0 0.0
        %1023 = vmatprep.subr.mxu0 0.0
        %1024 = vmatpush1.msra.mxu0 0.0
        %1025 = vmatprep.subr.mxu0 0.0
        %1026 = vmatpush1.msra.mxu0 0.0
        %1027 = vmatprep.subr.mxu0 0.0
        %1028 = vmatpush1.msra.mxu0 0.0
        %1029 = vmatprep.subr.mxu0 0.0
        %1030 = vmatpush1.msra.mxu0 0.0
        %1031 = vmatprep.subr.mxu0 0.0
        %1032 = vmatpush1.msra.mxu0 0.0
        %1033 = vmatprep.subr.mxu0 0.0
        %1034 = vmatpush1.msra.mxu0 0.0
        %1035 = vmatprep.subr.mxu0 0.0
        %1036 = vmatpush1.msra.mxu0 0.0
        %1037 = vmatprep.mubr.f32.mxu0 0.0
        %1038 = vmatmul.mubr.f32.gmra.mrb[0].mxu0 %v965
        %v1039 = vpop.f32.mrb[0].mxu0
        %v1040 = vadd.f32 0.0, %v1039
        %v1041 = vpop.f32.mrb[0].mxu0
        %v1042 = vadd.f32 0.0, %v1041
        %1043 = vdwg.mxu0
        %v1044 = vadd.f32 %v944, %v1040
        %v1045 = vadd.f32 %v945, %v1042
        %1046 = vrot.lane.b32.xlu0 %v259, 111
        %v1047 = vpop.permute.xlu0 %1046
        %1048 = vrot.lane.b32.xlu0 %v261, 111
        %v1049 = vpop.permute.xlu0 %1048
        %vm1050 = vcmp.lt.s32.totalorder %v268, 111
        %v1051 = vsel %vm1050, %v1047, %v1049
        %v1052 = vsel %vm1050, %v1049, %v1047
        %s1053 = scalar_lea.vmem %s0, 64
        %v1054 = vld [vmem:[%s1053] sm:$0xff]
        %v1056 = vcombine.high %v1054, %v1054
        %v1058 = vmul.f32 %v1051, %v1054
        %v1059 = vmul.f32 %v1052, %v1056
        %s1060 = sadd.s32 %s278, 8
        %s1061 = smul.u32 %s1060, 4
        %s1062 = scalar_lea.vmem %s2, %s1061
        %v1063 = vld [vmem:[%s1062] sm:$0xf]
        %v1065 = vsel %vm300, %v1063, 0
        %v1068 = vsel %vm304, %v1058, 0
        %v1071 = vsel %vm304, %v1059, 0
        %1073 = vmatprep.subr.mxu0 %v1071
        %1074 = vmatpush1.msra.mxu0 %v1068
        %1075 = vmatprep.subr.mxu0 0.0
        %1076 = vmatpush1.msra.mxu0 0.0
        %1077 = vmatprep.subr.mxu0 0.0
        %1078 = vmatpush1.msra.mxu0 0.0
        %1079 = vmatprep.subr.mxu0 0.0
        %1080 = vmatpush1.msra.mxu0 0.0
        %1081 = vmatprep.subr.mxu0 0.0
        %1082 = vmatpush1.msra.mxu0 0.0
        %1083 = vmatprep.subr.mxu0 0.0
        %1084 = vmatpush1.msra.mxu0 0.0
        %1085 = vmatprep.subr.mxu0 0.0
        %1086 = vmatpush1.msra.mxu0 0.0
        %1087 = vmatprep.subr.mxu0 0.0
        %1088 = vmatpush1.msra.mxu0 0.0
        %1089 = vmatprep.subr.mxu0 0.0
        %1090 = vmatpush1.msra.mxu0 0.0
        %1091 = vmatprep.subr.mxu0 0.0
        %1092 = vmatpush1.msra.mxu0 0.0
        %1093 = vmatprep.subr.mxu0 0.0
        %1094 = vmatpush1.msra.mxu0 0.0
        %1095 = vmatprep.subr.mxu0 0.0
        %1096 = vmatpush1.msra.mxu0 0.0
        %1097 = vmatprep.subr.mxu0 0.0
        %1098 = vmatpush1.msra.mxu0 0.0
        %1099 = vmatprep.subr.mxu0 0.0
        %1100 = vmatpush1.msra.mxu0 0.0
        %1101 = vmatprep.subr.mxu0 0.0
        %1102 = vmatpush1.msra.mxu0 0.0
        %1103 = vmatprep.subr.mxu0 0.0
        %1104 = vmatpush1.msra.mxu0 0.0
        %1105 = vmatprep.subr.mxu0 0.0
        %1106 = vmatpush1.msra.mxu0 0.0
        %1107 = vmatprep.subr.mxu0 0.0
        %1108 = vmatpush1.msra.mxu0 0.0
        %1109 = vmatprep.subr.mxu0 0.0
        %1110 = vmatpush1.msra.mxu0 0.0
        %1111 = vmatprep.subr.mxu0 0.0
        %1112 = vmatpush1.msra.mxu0 0.0
        %1113 = vmatprep.subr.mxu0 0.0
        %1114 = vmatpush1.msra.mxu0 0.0
        %1115 = vmatprep.subr.mxu0 0.0
        %1116 = vmatpush1.msra.mxu0 0.0
        %1117 = vmatprep.subr.mxu0 0.0
        %1118 = vmatpush1.msra.mxu0 0.0
        %1119 = vmatprep.subr.mxu0 0.0
        %1120 = vmatpush1.msra.mxu0 0.0
        %1121 = vmatprep.subr.mxu0 0.0
        %1122 = vmatpush1.msra.mxu0 0.0
        %1123 = vmatprep.subr.mxu0 0.0
        %1124 = vmatpush1.msra.mxu0 0.0
        %1125 = vmatprep.subr.mxu0 0.0
        %1126 = vmatpush1.msra.mxu0 0.0
        %1127 = vmatprep.subr.mxu0 0.0
        %1128 = vmatpush1.msra.mxu0 0.0
        %1129 = vmatprep.subr.mxu0 0.0
        %1130 = vmatpush1.msra.mxu0 0.0
        %1131 = vmatprep.subr.mxu0 0.0
        %1132 = vmatpush1.msra.mxu0 0.0
        %1133 = vmatprep.subr.mxu0 0.0
        %1134 = vmatpush1.msra.mxu0 0.0
        %1135 = vmatprep.subr.mxu0 0.0
        %1136 = vmatpush1.msra.mxu0 0.0
        %1137 = vmatprep.mubr.f32.mxu0 0.0
        %1138 = vmatmul.mubr.f32.gmra.mrb[0].mxu0 %v1065
        %v1139 = vpop.f32.mrb[0].mxu0
        %v1140 = vadd.f32 0.0, %v1139
        %v1141 = vpop.f32.mrb[0].mxu0
        %v1142 = vadd.f32 0.0, %v1141
        %1143 = vdwg.mxu0
        %v1144 = vadd.f32 %v1044, %v1140
        %v1145 = vadd.f32 %v1045, %v1142
        %s1146 = smul.u32 %s254, 4
        %s1147 = scalar_lea.vmem %s3, %s1146
        %v1148 = vld [vmem:[%s1147] sm:$0xf]
        %1150 = vset.pattern.permute.xlu0 0
        %1151 = vperm.xlu0 %1150, %v1148
        %v1152 = vpop.permute.xlu0 %1151
        %v1154 = vadd.f32 %v1144, %v1152
        %v1155 = vadd.f32 %v1145, %v1152
        %v1156 = vmax.f32 %v1154, 0.0
        %v1157 = vmax.f32 %v1155, 0.0
        %1158 = vrot.lane.b32.xlu0 %v1156, 17
        %v1159 = vpop.permute.xlu0 %1158
        %1160 = vrot.lane.b32.xlu0 %v1157, 17
        %v1161 = vpop.permute.xlu0 %1160
        %v1162 = vsel %vm269, %v1159, %v1161
        %v1163 = vsel %vm269, %v1161, %v1159
        %v1164 = vmul.f32 %v1163, %v272
        %v1165 = vmul.f32 %v1162, %v274
        %s1166 = scalar_lea.vmem %s4, %s279
        %v1167 = vld [vmem:[%s1166] sm:$0xf]
        %1168 = vrot.lane.b32.xlu0 %v1156, 16
        %v1169 = vpop.permute.xlu0 %1168
        %1170 = vrot.lane.b32.xlu0 %v1157, 16
        %v1171 = vpop.permute.xlu0 %1170
        %v1172 = vsel %vm286, %v1169, %v1171
        %v1173 = vsel %vm286, %v1171, %v1169
        %v1174 = vmul.f32 %v1173, %v290
        %v1175 = vmul.f32 %v1172, %v292
        %s1176 = scalar_lea.vmem %s4, %s297
        %v1177 = vld [vmem:[%s1176] sm:$0xf]
        %v1179 = vsel %vm300, %v1177, 0
        %v1182 = vsel %vm304, %v1174, 0
        %v1185 = vsel %vm304, %v1175, 0
        %1187 = vmatprep.subr.mxu0 %v1185
        %1188 = vmatpush1.msra.mxu0 %v1182
        %1189 = vmatprep.subr.mxu0 0.0
        %1190 = vmatpush1.msra.mxu0 0.0
        %1191 = vmatprep.subr.mxu0 0.0
        %1192 = vmatpush1.msra.mxu0 0.0
        %1193 = vmatprep.subr.mxu0 0.0
        %1194 = vmatpush1.msra.mxu0 0.0
        %1195 = vmatprep.subr.mxu0 0.0
        %1196 = vmatpush1.msra.mxu0 0.0
        %1197 = vmatprep.subr.mxu0 0.0
        %1198 = vmatpush1.msra.mxu0 0.0
        %1199 = vmatprep.subr.mxu0 0.0
        %1200 = vmatpush1.msra.mxu0 0.0
        %1201 = vmatprep.subr.mxu0 0.0
        %1202 = vmatpush1.msra.mxu0 0.0
        %1203 = vmatprep.subr.mxu0 0.0
        %1204 = vmatpush1.msra.mxu0 0.0
        %1205 = vmatprep.subr.mxu0 0.0
        %1206 = vmatpush1.msra.mxu0 0.0
        %1207 = vmatprep.subr.mxu0 0.0
        %1208 = vmatpush1.msra.mxu0 0.0
        %1209 = vmatprep.subr.mxu0 0.0
        %1210 = vmatpush1.msra.mxu0 0.0
        %1211 = vmatprep.subr.mxu0 0.0
        %1212 = vmatpush1.msra.mxu0 0.0
        %1213 = vmatprep.subr.mxu0 0.0
        %1214 = vmatpush1.msra.mxu0 0.0
        %1215 = vmatprep.subr.mxu0 0.0
        %1216 = vmatpush1.msra.mxu0 0.0
        %1217 = vmatprep.subr.mxu0 0.0
        %1218 = vmatpush1.msra.mxu0 0.0
        %1219 = vmatprep.subr.mxu0 0.0
        %1220 = vmatpush1.msra.mxu0 0.0
        %1221 = vmatprep.subr.mxu0 0.0
        %1222 = vmatpush1.msra.mxu0 0.0
        %1223 = vmatprep.subr.mxu0 0.0
        %1224 = vmatpush1.msra.mxu0 0.0
        %1225 = vmatprep.subr.mxu0 0.0
        %1226 = vmatpush1.msra.mxu0 0.0
        %1227 = vmatprep.subr.mxu0 0.0
        %1228 = vmatpush1.msra.mxu0 0.0
        %1229 = vmatprep.subr.mxu0 0.0
        %1230 = vmatpush1.msra.mxu0 0.0
        %1231 = vmatprep.subr.mxu0 0.0
        %1232 = vmatpush1.msra.mxu0 0.0
        %1233 = vmatprep.subr.mxu0 0.0
        %1234 = vmatpush1.msra.mxu0 0.0
        %1235 = vmatprep.subr.mxu0 0.0
        %1236 = vmatpush1.msra.mxu0 0.0
        %1237 = vmatprep.subr.mxu0 0.0
        %1238 = vmatpush1.msra.mxu0 0.0
        %1239 = vmatprep.subr.mxu0 0.0
        %1240 = vmatpush1.msra.mxu0 0.0
        %1241 = vmatprep.subr.mxu0 0.0
        %1242 = vmatpush1.msra.mxu0 0.0
        %1243 = vmatprep.subr.mxu0 0.0
        %1244 = vmatpush1.msra.mxu0 0.0
        %1245 = vmatprep.subr.mxu0 0.0
        %1246 = vmatpush1.msra.mxu0 0.0
        %1247 = vmatprep.subr.mxu0 0.0
        %1248 = vmatpush1.msra.mxu0 0.0
        %1249 = vmatprep.subr.mxu0 0.0
        %1250 = vmatpush1.msra.mxu0 0.0
        %1251 = vmatprep.mubr.f32.mxu0 0.0
        %1252 = vmatmul.mubr.f32.gmra.mrb[0].mxu0 %v1179
        %v1253 = vpop.f32.mrb[0].mxu0
        %v1254 = vadd.f32 0.0, %v1253
        %v1255 = vpop.f32.mrb[0].mxu0
        %v1256 = vadd.f32 0.0, %v1255
        %1257 = vdwg.mxu0
        %v1259 = vsel %vm300, %v1167, 0
        %v1262 = vsel %vm304, %v1164, 0
        %v1265 = vsel %vm304, %v1165, 0
        %1267 = vmatprep.subr.mxu0 %v1265
        %1268 = vmatpush1.msra.mxu0 %v1262
        %1269 = vmatprep.subr.mxu0 0.0
        %1270 = vmatpush1.msra.mxu0 0.0
        %1271 = vmatprep.subr.mxu0 0.0
        %1272 = vmatpush1.msra.mxu0 0.0
        %1273 = vmatprep.subr.mxu0 0.0
        %1274 = vmatpush1.msra.mxu0 0.0
        %1275 = vmatprep.subr.mxu0 0.0
        %1276 = vmatpush1.msra.mxu0 0.0
        %1277 = vmatprep.subr.mxu0 0.0
        %1278 = vmatpush1.msra.mxu0 0.0
        %1279 = vmatprep.subr.mxu0 0.0
        %1280 = vmatpush1.msra.mxu0 0.0
        %1281 = vmatprep.subr.mxu0 0.0
        %1282 = vmatpush1.msra.mxu0 0.0
        %1283 = vmatprep.subr.mxu0 0.0
        %1284 = vmatpush1.msra.mxu0 0.0
        %1285 = vmatprep.subr.mxu0 0.0
        %1286 = vmatpush1.msra.mxu0 0.0
        %1287 = vmatprep.subr.mxu0 0.0
        %1288 = vmatpush1.msra.mxu0 0.0
        %1289 = vmatprep.subr.mxu0 0.0
        %1290 = vmatpush1.msra.mxu0 0.0
        %1291 = vmatprep.subr.mxu0 0.0
        %1292 = vmatpush1.msra.mxu0 0.0
        %1293 = vmatprep.subr.mxu0 0.0
        %1294 = vmatpush1.msra.mxu0 0.0
        %1295 = vmatprep.subr.mxu0 0.0
        %1296 = vmatpush1.msra.mxu0 0.0
        %1297 = vmatprep.subr.mxu0 0.0
        %1298 = vmatpush1.msra.mxu0 0.0
        %1299 = vmatprep.subr.mxu0 0.0
        %1300 = vmatpush1.msra.mxu0 0.0
        %1301 = vmatprep.subr.mxu0 0.0
        %1302 = vmatpush1.msra.mxu0 0.0
        %1303 = vmatprep.subr.mxu0 0.0
        %1304 = vmatpush1.msra.mxu0 0.0
        %1305 = vmatprep.subr.mxu0 0.0
        %1306 = vmatpush1.msra.mxu0 0.0
        %1307 = vmatprep.subr.mxu0 0.0
        %1308 = vmatpush1.msra.mxu0 0.0
        %1309 = vmatprep.subr.mxu0 0.0
        %1310 = vmatpush1.msra.mxu0 0.0
        %1311 = vmatprep.subr.mxu0 0.0
        %1312 = vmatpush1.msra.mxu0 0.0
        %1313 = vmatprep.subr.mxu0 0.0
        %1314 = vmatpush1.msra.mxu0 0.0
        %1315 = vmatprep.subr.mxu0 0.0
        %1316 = vmatpush1.msra.mxu0 0.0
        %1317 = vmatprep.subr.mxu0 0.0
        %1318 = vmatpush1.msra.mxu0 0.0
        %1319 = vmatprep.subr.mxu0 0.0
        %1320 = vmatpush1.msra.mxu0 0.0
        %1321 = vmatprep.subr.mxu0 0.0
        %1322 = vmatpush1.msra.mxu0 0.0
        %1323 = vmatprep.subr.mxu0 0.0
        %1324 = vmatpush1.msra.mxu0 0.0
        %1325 = vmatprep.subr.mxu0 0.0
        %1326 = vmatpush1.msra.mxu0 0.0
        %1327 = vmatprep.subr.mxu0 0.0
        %1328 = vmatpush1.msra.mxu0 0.0
        %1329 = vmatprep.subr.mxu0 0.0
        %1330 = vmatpush1.msra.mxu0 0.0
        %1331 = vmatprep.mubr.f32.mxu0 0.0
        %1332 = vmatmul.mubr.f32.gmra.mrb[0].mxu0 %v1259
        %v1333 = vpop.f32.mrb[0].mxu0
        %v1334 = vadd.f32 %v1254, %v1333
        %v1335 = vpop.f32.mrb[0].mxu0
        %v1336 = vadd.f32 %v1256, %v1335
        %1337 = vdwg.mxu0
        %1338 = vrot.lane.b32.xlu0 %v1156, 15
        %v1339 = vpop.permute.xlu0 %1338
        %1340 = vrot.lane.b32.xlu0 %v1157, 15
        %v1341 = vpop.permute.xlu0 %1340
        %v1342 = vsel %vm466, %v1339, %v1341
        %v1343 = vsel %vm466, %v1341, %v1339
        %v1344 = vmul.f32 %v1343, %v470
        %v1345 = vmul.f32 %v1342, %v472
        %s1346 = scalar_lea.vmem %s4, %s477
        %v1347 = vld [vmem:[%s1346] sm:$0xf]
        %v1349 = vsel %vm300, %v1347, 0
        %v1352 = vsel %vm304, %v1344, 0
        %v1355 = vsel %vm304, %v1345, 0
        %1357 = vmatprep.subr.mxu0 %v1355
        %1358 = vmatpush1.msra.mxu0 %v1352
        %1359 = vmatprep.subr.mxu0 0.0
        %1360 = vmatpush1.msra.mxu0 0.0
        %1361 = vmatprep.subr.mxu0 0.0
        %1362 = vmatpush1.msra.mxu0 0.0
        %1363 = vmatprep.subr.mxu0 0.0
        %1364 = vmatpush1.msra.mxu0 0.0
        %1365 = vmatprep.subr.mxu0 0.0
        %1366 = vmatpush1.msra.mxu0 0.0
        %1367 = vmatprep.subr.mxu0 0.0
        %1368 = vmatpush1.msra.mxu0 0.0
        %1369 = vmatprep.subr.mxu0 0.0
        %1370 = vmatpush1.msra.mxu0 0.0
        %1371 = vmatprep.subr.mxu0 0.0
        %1372 = vmatpush1.msra.mxu0 0.0
        %1373 = vmatprep.subr.mxu0 0.0
        %1374 = vmatpush1.msra.mxu0 0.0
        %1375 = vmatprep.subr.mxu0 0.0
        %1376 = vmatpush1.msra.mxu0 0.0
        %1377 = vmatprep.subr.mxu0 0.0
        %1378 = vmatpush1.msra.mxu0 0.0
        %1379 = vmatprep.subr.mxu0 0.0
        %1380 = vmatpush1.msra.mxu0 0.0
        %1381 = vmatprep.subr.mxu0 0.0
        %1382 = vmatpush1.msra.mxu0 0.0
        %1383 = vmatprep.subr.mxu0 0.0
        %1384 = vmatpush1.msra.mxu0 0.0
        %1385 = vmatprep.subr.mxu0 0.0
        %1386 = vmatpush1.msra.mxu0 0.0
        %1387 = vmatprep.subr.mxu0 0.0
        %1388 = vmatpush1.msra.mxu0 0.0
        %1389 = vmatprep.subr.mxu0 0.0
        %1390 = vmatpush1.msra.mxu0 0.0
        %1391 = vmatprep.subr.mxu0 0.0
        %1392 = vmatpush1.msra.mxu0 0.0
        %1393 = vmatprep.subr.mxu0 0.0
        %1394 = vmatpush1.msra.mxu0 0.0
        %1395 = vmatprep.subr.mxu0 0.0
        %1396 = vmatpush1.msra.mxu0 0.0
        %1397 = vmatprep.subr.mxu0 0.0
        %1398 = vmatpush1.msra.mxu0 0.0
        %1399 = vmatprep.subr.mxu0 0.0
        %1400 = vmatpush1.msra.mxu0 0.0
        %1401 = vmatprep.subr.mxu0 0.0
        %1402 = vmatpush1.msra.mxu0 0.0
        %1403 = vmatprep.subr.mxu0 0.0
        %1404 = vmatpush1.msra.mxu0 0.0
        %1405 = vmatprep.subr.mxu0 0.0
        %1406 = vmatpush1.msra.mxu0 0.0
        %1407 = vmatprep.subr.mxu0 0.0
        %1408 = vmatpush1.msra.mxu0 0.0
        %1409 = vmatprep.subr.mxu0 0.0
        %1410 = vmatpush1.msra.mxu0 0.0
        %1411 = vmatprep.subr.mxu0 0.0
        %1412 = vmatpush1.msra.mxu0 0.0
        %1413 = vmatprep.subr.mxu0 0.0
        %1414 = vmatpush1.msra.mxu0 0.0
        %1415 = vmatprep.subr.mxu0 0.0
        %1416 = vmatpush1.msra.mxu0 0.0
        %1417 = vmatprep.subr.mxu0 0.0
        %1418 = vmatpush1.msra.mxu0 0.0
        %1419 = vmatprep.subr.mxu0 0.0
        %1420 = vmatpush1.msra.mxu0 0.0
        %1421 = vmatprep.mubr.f32.mxu0 0.0
        %1422 = vmatmul.mubr.f32.gmra.mrb[0].mxu0 %v1349
        %v1423 = vpop.f32.mrb[0].mxu0
        %v1424 = vadd.f32 0.0, %v1423
        %v1425 = vpop.f32.mrb[0].mxu0
        %v1426 = vadd.f32 0.0, %v1425
        %1427 = vdwg.mxu0
        %v1428 = vadd.f32 %v1334, %v1424
        %v1429 = vadd.f32 %v1336, %v1426
        %1430 = vrot.lane.b32.xlu0 %v1156, 1
        %v1431 = vpop.permute.xlu0 %1430
        %1432 = vrot.lane.b32.xlu0 %v1157, 1
        %v1433 = vpop.permute.xlu0 %1432
        %v1434 = vsel %vm566, %v1431, %v1433
        %v1435 = vsel %vm566, %v1433, %v1431
        %v1436 = vmul.f32 %v1435, %v570
        %v1437 = vmul.f32 %v1434, %v572
        %s1438 = scalar_lea.vmem %s4, %s577
        %v1439 = vld [vmem:[%s1438] sm:$0xf]
        %v1441 = vsel %vm300, %v1439, 0
        %v1444 = vsel %vm304, %v1436, 0
        %v1447 = vsel %vm304, %v1437, 0
        %1449 = vmatprep.subr.mxu0 %v1447
        %1450 = vmatpush1.msra.mxu0 %v1444
        %1451 = vmatprep.subr.mxu0 0.0
        %1452 = vmatpush1.msra.mxu0 0.0
        %1453 = vmatprep.subr.mxu0 0.0
        %1454 = vmatpush1.msra.mxu0 0.0
        %1455 = vmatprep.subr.mxu0 0.0
        %1456 = vmatpush1.msra.mxu0 0.0
        %1457 = vmatprep.subr.mxu0 0.0
        %1458 = vmatpush1.msra.mxu0 0.0
        %1459 = vmatprep.subr.mxu0 0.0
        %1460 = vmatpush1.msra.mxu0 0.0
        %1461 = vmatprep.subr.mxu0 0.0
        %1462 = vmatpush1.msra.mxu0 0.0
        %1463 = vmatprep.subr.mxu0 0.0
        %1464 = vmatpush1.msra.mxu0 0.0
        %1465 = vmatprep.subr.mxu0 0.0
        %1466 = vmatpush1.msra.mxu0 0.0
        %1467 = vmatprep.subr.mxu0 0.0
        %1468 = vmatpush1.msra.mxu0 0.0
        %1469 = vmatprep.subr.mxu0 0.0
        %1470 = vmatpush1.msra.mxu0 0.0
        %1471 = vmatprep.subr.mxu0 0.0
        %1472 = vmatpush1.msra.mxu0 0.0
        %1473 = vmatprep.subr.mxu0 0.0
        %1474 = vmatpush1.msra.mxu0 0.0
        %1475 = vmatprep.subr.mxu0 0.0
        %1476 = vmatpush1.msra.mxu0 0.0
        %1477 = vmatprep.subr.mxu0 0.0
        %1478 = vmatpush1.msra.mxu0 0.0
        %1479 = vmatprep.subr.mxu0 0.0
        %1480 = vmatpush1.msra.mxu0 0.0
        %1481 = vmatprep.subr.mxu0 0.0
        %1482 = vmatpush1.msra.mxu0 0.0
        %1483 = vmatprep.subr.mxu0 0.0
        %1484 = vmatpush1.msra.mxu0 0.0
        %1485 = vmatprep.subr.mxu0 0.0
        %1486 = vmatpush1.msra.mxu0 0.0
        %1487 = vmatprep.subr.mxu0 0.0
        %1488 = vmatpush1.msra.mxu0 0.0
        %1489 = vmatprep.subr.mxu0 0.0
        %1490 = vmatpush1.msra.mxu0 0.0
        %1491 = vmatprep.subr.mxu0 0.0
        %1492 = vmatpush1.msra.mxu0 0.0
        %1493 = vmatprep.subr.mxu0 0.0
        %1494 = vmatpush1.msra.mxu0 0.0
        %1495 = vmatprep.subr.mxu0 0.0
        %1496 = vmatpush1.msra.mxu0 0.0
        %1497 = vmatprep.subr.mxu0 0.0
        %1498 = vmatpush1.msra.mxu0 0.0
        %1499 = vmatprep.subr.mxu0 0.0
        %1500 = vmatpush1.msra.mxu0 0.0
        %1501 = vmatprep.subr.mxu0 0.0
        %1502 = vmatpush1.msra.mxu0 0.0
        %1503 = vmatprep.subr.mxu0 0.0
        %1504 = vmatpush1.msra.mxu0 0.0
        %1505 = vmatprep.subr.mxu0 0.0
        %1506 = vmatpush1.msra.mxu0 0.0
        %1507 = vmatprep.subr.mxu0 0.0
        %1508 = vmatpush1.msra.mxu0 0.0
        %1509 = vmatprep.subr.mxu0 0.0
        %1510 = vmatpush1.msra.mxu0 0.0
        %1511 = vmatprep.subr.mxu0 0.0
        %1512 = vmatpush1.msra.mxu0 0.0
        %1513 = vmatprep.mubr.f32.mxu0 0.0
        %1514 = vmatmul.mubr.f32.gmra.mrb[0].mxu0 %v1441
        %v1515 = vpop.f32.mrb[0].mxu0
        %v1516 = vadd.f32 0.0, %v1515
        %v1517 = vpop.f32.mrb[0].mxu0
        %v1518 = vadd.f32 0.0, %v1517
        %1519 = vdwg.mxu0
        %v1520 = vadd.f32 %v1428, %v1516
        %v1521 = vadd.f32 %v1429, %v1518
        %s1522 = scalar_lea.vmem %s4, %s663
        %v1523 = vld [vmem:[%s1522] sm:$0xf]
        %v1525 = vsel %vm300, %v1523, 0
        %v1528 = vsel %vm304, %v1156, 0
        %v1531 = vsel %vm304, %v1157, 0
        %1533 = vmatprep.subr.mxu0 %v1531
        %1534 = vmatpush1.msra.mxu0 %v1528
        %1535 = vmatprep.subr.mxu0 0.0
        %1536 = vmatpush1.msra.mxu0 0.0
        %1537 = vmatprep.subr.mxu0 0.0
        %1538 = vmatpush1.msra.mxu0 0.0
        %1539 = vmatprep.subr.mxu0 0.0
        %1540 = vmatpush1.msra.mxu0 0.0
        %1541 = vmatprep.subr.mxu0 0.0
        %1542 = vmatpush1.msra.mxu0 0.0
        %1543 = vmatprep.subr.mxu0 0.0
        %1544 = vmatpush1.msra.mxu0 0.0
        %1545 = vmatprep.subr.mxu0 0.0
        %1546 = vmatpush1.msra.mxu0 0.0
        %1547 = vmatprep.subr.mxu0 0.0
        %1548 = vmatpush1.msra.mxu0 0.0
        %1549 = vmatprep.subr.mxu0 0.0
        %1550 = vmatpush1.msra.mxu0 0.0
        %1551 = vmatprep.subr.mxu0 0.0
        %1552 = vmatpush1.msra.mxu0 0.0
        %1553 = vmatprep.subr.mxu0 0.0
        %1554 = vmatpush1.msra.mxu0 0.0
        %1555 = vmatprep.subr.mxu0 0.0
        %1556 = vmatpush1.msra.mxu0 0.0
        %1557 = vmatprep.subr.mxu0 0.0
        %1558 = vmatpush1.msra.mxu0 0.0
        %1559 = vmatprep.subr.mxu0 0.0
        %1560 = vmatpush1.msra.mxu0 0.0
        %1561 = vmatprep.subr.mxu0 0.0
        %1562 = vmatpush1.msra.mxu0 0.0
        %1563 = vmatprep.subr.mxu0 0.0
        %1564 = vmatpush1.msra.mxu0 0.0
        %1565 = vmatprep.subr.mxu0 0.0
        %1566 = vmatpush1.msra.mxu0 0.0
        %1567 = vmatprep.subr.mxu0 0.0
        %1568 = vmatpush1.msra.mxu0 0.0
        %1569 = vmatprep.subr.mxu0 0.0
        %1570 = vmatpush1.msra.mxu0 0.0
        %1571 = vmatprep.subr.mxu0 0.0
        %1572 = vmatpush1.msra.mxu0 0.0
        %1573 = vmatprep.subr.mxu0 0.0
        %1574 = vmatpush1.msra.mxu0 0.0
        %1575 = vmatprep.subr.mxu0 0.0
        %1576 = vmatpush1.msra.mxu0 0.0
        %1577 = vmatprep.subr.mxu0 0.0
        %1578 = vmatpush1.msra.mxu0 0.0
        %1579 = vmatprep.subr.mxu0 0.0
        %1580 = vmatpush1.msra.mxu0 0.0
        %1581 = vmatprep.subr.mxu0 0.0
        %1582 = vmatpush1.msra.mxu0 0.0
        %1583 = vmatprep.subr.mxu0 0.0
        %1584 = vmatpush1.msra.mxu0 0.0
        %1585 = vmatprep.subr.mxu0 0.0
        %1586 = vmatpush1.msra.mxu0 0.0
        %1587 = vmatprep.subr.mxu0 0.0
        %1588 = vmatpush1.msra.mxu0 0.0
        %1589 = vmatprep.subr.mxu0 0.0
        %1590 = vmatpush1.msra.mxu0 0.0
        %1591 = vmatprep.subr.mxu0 0.0
        %1592 = vmatpush1.msra.mxu0 0.0
        %1593 = vmatprep.subr.mxu0 0.0
        %1594 = vmatpush1.msra.mxu0 0.0
        %1595 = vmatprep.subr.mxu0 0.0
        %1596 = vmatpush1.msra.mxu0 0.0
        %1597 = vmatprep.mubr.f32.mxu0 0.0
        %1598 = vmatmul.mubr.f32.gmra.mrb[0].mxu0 %v1525
        %v1599 = vpop.f32.mrb[0].mxu0
        %v1600 = vadd.f32 0.0, %v1599
        %v1601 = vpop.f32.mrb[0].mxu0
        %v1602 = vadd.f32 0.0, %v1601
        %1603 = vdwg.mxu0
        %v1604 = vadd.f32 %v1520, %v1600
        %v1605 = vadd.f32 %v1521, %v1602
        %1606 = vrot.lane.b32.xlu0 %v1156, 127
        %v1607 = vpop.permute.xlu0 %1606
        %1608 = vrot.lane.b32.xlu0 %v1157, 127
        %v1609 = vpop.permute.xlu0 %1608
        %v1610 = vsel %vm750, %v1607, %v1609
        %v1611 = vsel %vm750, %v1609, %v1607
        %v1612 = vmul.f32 %v1610, %v754
        %v1613 = vmul.f32 %v1611, %v756
        %s1614 = scalar_lea.vmem %s4, %s761
        %v1615 = vld [vmem:[%s1614] sm:$0xf]
        %v1617 = vsel %vm300, %v1615, 0
        %v1620 = vsel %vm304, %v1612, 0
        %v1623 = vsel %vm304, %v1613, 0
        %1625 = vmatprep.subr.mxu0 %v1623
        %1626 = vmatpush1.msra.mxu0 %v1620
        %1627 = vmatprep.subr.mxu0 0.0
        %1628 = vmatpush1.msra.mxu0 0.0
        %1629 = vmatprep.subr.mxu0 0.0
        %1630 = vmatpush1.msra.mxu0 0.0
        %1631 = vmatprep.subr.mxu0 0.0
        %1632 = vmatpush1.msra.mxu0 0.0
        %1633 = vmatprep.subr.mxu0 0.0
        %1634 = vmatpush1.msra.mxu0 0.0
        %1635 = vmatprep.subr.mxu0 0.0
        %1636 = vmatpush1.msra.mxu0 0.0
        %1637 = vmatprep.subr.mxu0 0.0
        %1638 = vmatpush1.msra.mxu0 0.0
        %1639 = vmatprep.subr.mxu0 0.0
        %1640 = vmatpush1.msra.mxu0 0.0
        %1641 = vmatprep.subr.mxu0 0.0
        %1642 = vmatpush1.msra.mxu0 0.0
        %1643 = vmatprep.subr.mxu0 0.0
        %1644 = vmatpush1.msra.mxu0 0.0
        %1645 = vmatprep.subr.mxu0 0.0
        %1646 = vmatpush1.msra.mxu0 0.0
        %1647 = vmatprep.subr.mxu0 0.0
        %1648 = vmatpush1.msra.mxu0 0.0
        %1649 = vmatprep.subr.mxu0 0.0
        %1650 = vmatpush1.msra.mxu0 0.0
        %1651 = vmatprep.subr.mxu0 0.0
        %1652 = vmatpush1.msra.mxu0 0.0
        %1653 = vmatprep.subr.mxu0 0.0
        %1654 = vmatpush1.msra.mxu0 0.0
        %1655 = vmatprep.subr.mxu0 0.0
        %1656 = vmatpush1.msra.mxu0 0.0
        %1657 = vmatprep.subr.mxu0 0.0
        %1658 = vmatpush1.msra.mxu0 0.0
        %1659 = vmatprep.subr.mxu0 0.0
        %1660 = vmatpush1.msra.mxu0 0.0
        %1661 = vmatprep.subr.mxu0 0.0
        %1662 = vmatpush1.msra.mxu0 0.0
        %1663 = vmatprep.subr.mxu0 0.0
        %1664 = vmatpush1.msra.mxu0 0.0
        %1665 = vmatprep.subr.mxu0 0.0
        %1666 = vmatpush1.msra.mxu0 0.0
        %1667 = vmatprep.subr.mxu0 0.0
        %1668 = vmatpush1.msra.mxu0 0.0
        %1669 = vmatprep.subr.mxu0 0.0
        %1670 = vmatpush1.msra.mxu0 0.0
        %1671 = vmatprep.subr.mxu0 0.0
        %1672 = vmatpush1.msra.mxu0 0.0
        %1673 = vmatprep.subr.mxu0 0.0
        %1674 = vmatpush1.msra.mxu0 0.0
        %1675 = vmatprep.subr.mxu0 0.0
        %1676 = vmatpush1.msra.mxu0 0.0
        %1677 = vmatprep.subr.mxu0 0.0
        %1678 = vmatpush1.msra.mxu0 0.0
        %1679 = vmatprep.subr.mxu0 0.0
        %1680 = vmatpush1.msra.mxu0 0.0
        %1681 = vmatprep.subr.mxu0 0.0
        %1682 = vmatpush1.msra.mxu0 0.0
        %1683 = vmatprep.subr.mxu0 0.0
        %1684 = vmatpush1.msra.mxu0 0.0
        %1685 = vmatprep.subr.mxu0 0.0
        %1686 = vmatpush1.msra.mxu0 0.0
        %1687 = vmatprep.subr.mxu0 0.0
        %1688 = vmatpush1.msra.mxu0 0.0
        %1689 = vmatprep.mubr.f32.mxu0 0.0
        %1690 = vmatmul.mubr.f32.gmra.mrb[0].mxu0 %v1617
        %v1691 = vpop.f32.mrb[0].mxu0
        %v1692 = vadd.f32 0.0, %v1691
        %v1693 = vpop.f32.mrb[0].mxu0
        %v1694 = vadd.f32 0.0, %v1693
        %1695 = vdwg.mxu0
        %v1696 = vadd.f32 %v1604, %v1692
        %v1697 = vadd.f32 %v1605, %v1694
        %1698 = vrot.lane.b32.xlu0 %v1156, 113
        %v1699 = vpop.permute.xlu0 %1698
        %1700 = vrot.lane.b32.xlu0 %v1157, 113
        %v1701 = vpop.permute.xlu0 %1700
        %v1702 = vsel %vm850, %v1699, %v1701
        %v1703 = vsel %vm850, %v1701, %v1699
        %v1704 = vmul.f32 %v1702, %v854
        %v1705 = vmul.f32 %v1703, %v856
        %s1706 = scalar_lea.vmem %s4, %s861
        %v1707 = vld [vmem:[%s1706] sm:$0xf]
        %v1709 = vsel %vm300, %v1707, 0
        %v1712 = vsel %vm304, %v1704, 0
        %v1715 = vsel %vm304, %v1705, 0
        %1717 = vmatprep.subr.mxu0 %v1715
        %1718 = vmatpush1.msra.mxu0 %v1712
        %1719 = vmatprep.subr.mxu0 0.0
        %1720 = vmatpush1.msra.mxu0 0.0
        %1721 = vmatprep.subr.mxu0 0.0
        %1722 = vmatpush1.msra.mxu0 0.0
        %1723 = vmatprep.subr.mxu0 0.0
        %1724 = vmatpush1.msra.mxu0 0.0
        %1725 = vmatprep.subr.mxu0 0.0
        %1726 = vmatpush1.msra.mxu0 0.0
        %1727 = vmatprep.subr.mxu0 0.0
        %1728 = vmatpush1.msra.mxu0 0.0
        %1729 = vmatprep.subr.mxu0 0.0
        %1730 = vmatpush1.msra.mxu0 0.0
        %1731 = vmatprep.subr.mxu0 0.0
        %1732 = vmatpush1.msra.mxu0 0.0
        %1733 = vmatprep.subr.mxu0 0.0
        %1734 = vmatpush1.msra.mxu0 0.0
        %1735 = vmatprep.subr.mxu0 0.0
        %1736 = vmatpush1.msra.mxu0 0.0
        %1737 = vmatprep.subr.mxu0 0.0
        %1738 = vmatpush1.msra.mxu0 0.0
        %1739 = vmatprep.subr.mxu0 0.0
        %1740 = vmatpush1.msra.mxu0 0.0
        %1741 = vmatprep.subr.mxu0 0.0
        %1742 = vmatpush1.msra.mxu0 0.0
        %1743 = vmatprep.subr.mxu0 0.0
        %1744 = vmatpush1.msra.mxu0 0.0
        %1745 = vmatprep.subr.mxu0 0.0
        %1746 = vmatpush1.msra.mxu0 0.0
        %1747 = vmatprep.subr.mxu0 0.0
        %1748 = vmatpush1.msra.mxu0 0.0
        %1749 = vmatprep.subr.mxu0 0.0
        %1750 = vmatpush1.msra.mxu0 0.0
        %1751 = vmatprep.subr.mxu0 0.0
        %1752 = vmatpush1.msra.mxu0 0.0
        %1753 = vmatprep.subr.mxu0 0.0
        %1754 = vmatpush1.msra.mxu0 0.0
        %1755 = vmatprep.subr.mxu0 0.0
        %1756 = vmatpush1.msra.mxu0 0.0
        %1757 = vmatprep.subr.mxu0 0.0
        %1758 = vmatpush1.msra.mxu0 0.0
        %1759 = vmatprep.subr.mxu0 0.0
        %1760 = vmatpush1.msra.mxu0 0.0
        %1761 = vmatprep.subr.mxu0 0.0
        %1762 = vmatpush1.msra.mxu0 0.0
        %1763 = vmatprep.subr.mxu0 0.0
        %1764 = vmatpush1.msra.mxu0 0.0
        %1765 = vmatprep.subr.mxu0 0.0
        %1766 = vmatpush1.msra.mxu0 0.0
        %1767 = vmatprep.subr.mxu0 0.0
        %1768 = vmatpush1.msra.mxu0 0.0
        %1769 = vmatprep.subr.mxu0 0.0
        %1770 = vmatpush1.msra.mxu0 0.0
        %1771 = vmatprep.subr.mxu0 0.0
        %1772 = vmatpush1.msra.mxu0 0.0
        %1773 = vmatprep.subr.mxu0 0.0
        %1774 = vmatpush1.msra.mxu0 0.0
        %1775 = vmatprep.subr.mxu0 0.0
        %1776 = vmatpush1.msra.mxu0 0.0
        %1777 = vmatprep.subr.mxu0 0.0
        %1778 = vmatpush1.msra.mxu0 0.0
        %1779 = vmatprep.subr.mxu0 0.0
        %1780 = vmatpush1.msra.mxu0 0.0
        %1781 = vmatprep.mubr.f32.mxu0 0.0
        %1782 = vmatmul.mubr.f32.gmra.mrb[0].mxu0 %v1709
        %v1783 = vpop.f32.mrb[0].mxu0
        %v1784 = vadd.f32 0.0, %v1783
        %v1785 = vpop.f32.mrb[0].mxu0
        %v1786 = vadd.f32 0.0, %v1785
        %1787 = vdwg.mxu0
        %v1788 = vadd.f32 %v1696, %v1784
        %v1789 = vadd.f32 %v1697, %v1786
        %1790 = vrot.lane.b32.xlu0 %v1156, 112
        %v1791 = vpop.permute.xlu0 %1790
        %1792 = vrot.lane.b32.xlu0 %v1157, 112
        %v1793 = vpop.permute.xlu0 %1792
        %v1794 = vsel %vm950, %v1791, %v1793
        %v1795 = vsel %vm950, %v1793, %v1791
        %v1796 = vmul.f32 %v1794, %v954
        %v1797 = vmul.f32 %v1795, %v956
        %s1798 = scalar_lea.vmem %s4, %s961
        %v1799 = vld [vmem:[%s1798] sm:$0xf]
        %v1801 = vsel %vm300, %v1799, 0
        %v1804 = vsel %vm304, %v1796, 0
        %v1807 = vsel %vm304, %v1797, 0
        %1809 = vmatprep.subr.mxu0 %v1807
        %1810 = vmatpush1.msra.mxu0 %v1804
        %1811 = vmatprep.subr.mxu0 0.0
        %1812 = vmatpush1.msra.mxu0 0.0
        %1813 = vmatprep.subr.mxu0 0.0
        %1814 = vmatpush1.msra.mxu0 0.0
        %1815 = vmatprep.subr.mxu0 0.0
        %1816 = vmatpush1.msra.mxu0 0.0
        %1817 = vmatprep.subr.mxu0 0.0
        %1818 = vmatpush1.msra.mxu0 0.0
        %1819 = vmatprep.subr.mxu0 0.0
        %1820 = vmatpush1.msra.mxu0 0.0
        %1821 = vmatprep.subr.mxu0 0.0
        %1822 = vmatpush1.msra.mxu0 0.0
        %1823 = vmatprep.subr.mxu0 0.0
        %1824 = vmatpush1.msra.mxu0 0.0
        %1825 = vmatprep.subr.mxu0 0.0
        %1826 = vmatpush1.msra.mxu0 0.0
        %1827 = vmatprep.subr.mxu0 0.0
        %1828 = vmatpush1.msra.mxu0 0.0
        %1829 = vmatprep.subr.mxu0 0.0
        %1830 = vmatpush1.msra.mxu0 0.0
        %1831 = vmatprep.subr.mxu0 0.0
        %1832 = vmatpush1.msra.mxu0 0.0
        %1833 = vmatprep.subr.mxu0 0.0
        %1834 = vmatpush1.msra.mxu0 0.0
        %1835 = vmatprep.subr.mxu0 0.0
        %1836 = vmatpush1.msra.mxu0 0.0
        %1837 = vmatprep.subr.mxu0 0.0
        %1838 = vmatpush1.msra.mxu0 0.0
        %1839 = vmatprep.subr.mxu0 0.0
        %1840 = vmatpush1.msra.mxu0 0.0
        %1841 = vmatprep.subr.mxu0 0.0
        %1842 = vmatpush1.msra.mxu0 0.0
        %1843 = vmatprep.subr.mxu0 0.0
        %1844 = vmatpush1.msra.mxu0 0.0
        %1845 = vmatprep.subr.mxu0 0.0
        %1846 = vmatpush1.msra.mxu0 0.0
        %1847 = vmatprep.subr.mxu0 0.0
        %1848 = vmatpush1.msra.mxu0 0.0
        %1849 = vmatprep.subr.mxu0 0.0
        %1850 = vmatpush1.msra.mxu0 0.0
        %1851 = vmatprep.subr.mxu0 0.0
        %1852 = vmatpush1.msra.mxu0 0.0
        %1853 = vmatprep.subr.mxu0 0.0
        %1854 = vmatpush1.msra.mxu0 0.0
        %1855 = vmatprep.subr.mxu0 0.0
        %1856 = vmatpush1.msra.mxu0 0.0
        %1857 = vmatprep.subr.mxu0 0.0
        %1858 = vmatpush1.msra.mxu0 0.0
        %1859 = vmatprep.subr.mxu0 0.0
        %1860 = vmatpush1.msra.mxu0 0.0
        %1861 = vmatprep.subr.mxu0 0.0
        %1862 = vmatpush1.msra.mxu0 0.0
        %1863 = vmatprep.subr.mxu0 0.0
        %1864 = vmatpush1.msra.mxu0 0.0
        %1865 = vmatprep.subr.mxu0 0.0
        %1866 = vmatpush1.msra.mxu0 0.0
        %1867 = vmatprep.subr.mxu0 0.0
        %1868 = vmatpush1.msra.mxu0 0.0
        %1869 = vmatprep.subr.mxu0 0.0
        %1870 = vmatpush1.msra.mxu0 0.0
        %1871 = vmatprep.subr.mxu0 0.0
        %1872 = vmatpush1.msra.mxu0 0.0
        %1873 = vmatprep.mubr.f32.mxu0 0.0
        %1874 = vmatmul.mubr.f32.gmra.mrb[0].mxu0 %v1801
        %v1875 = vpop.f32.mrb[0].mxu0
        %v1876 = vadd.f32 0.0, %v1875
        %v1877 = vpop.f32.mrb[0].mxu0
        %v1878 = vadd.f32 0.0, %v1877
        %1879 = vdwg.mxu0
        %v1880 = vadd.f32 %v1788, %v1876
        %v1881 = vadd.f32 %v1789, %v1878
        %1882 = vrot.lane.b32.xlu0 %v1156, 111
        %v1883 = vpop.permute.xlu0 %1882
        %1884 = vrot.lane.b32.xlu0 %v1157, 111
        %v1885 = vpop.permute.xlu0 %1884
        %v1886 = vsel %vm1050, %v1883, %v1885
        %v1887 = vsel %vm1050, %v1885, %v1883
        %v1888 = vmul.f32 %v1886, %v1054
        %v1889 = vmul.f32 %v1887, %v1056
        %s1890 = scalar_lea.vmem %s4, %s1061
        %v1891 = vld [vmem:[%s1890] sm:$0xf]
        %v1893 = vsel %vm300, %v1891, 0
        %v1896 = vsel %vm304, %v1888, 0
        %v1899 = vsel %vm304, %v1889, 0
        %1901 = vmatprep.subr.mxu0 %v1899
        %1902 = vmatpush1.msra.mxu0 %v1896
        %1903 = vmatprep.subr.mxu0 0.0
        %1904 = vmatpush1.msra.mxu0 0.0
        %1905 = vmatprep.subr.mxu0 0.0
        %1906 = vmatpush1.msra.mxu0 0.0
        %1907 = vmatprep.subr.mxu0 0.0
        %1908 = vmatpush1.msra.mxu0 0.0
        %1909 = vmatprep.subr.mxu0 0.0
        %1910 = vmatpush1.msra.mxu0 0.0
        %1911 = vmatprep.subr.mxu0 0.0
        %1912 = vmatpush1.msra.mxu0 0.0
        %1913 = vmatprep.subr.mxu0 0.0
        %1914 = vmatpush1.msra.mxu0 0.0
        %1915 = vmatprep.subr.mxu0 0.0
        %1916 = vmatpush1.msra.mxu0 0.0
        %1917 = vmatprep.subr.mxu0 0.0
        %1918 = vmatpush1.msra.mxu0 0.0
        %1919 = vmatprep.subr.mxu0 0.0
        %1920 = vmatpush1.msra.mxu0 0.0
        %1921 = vmatprep.subr.mxu0 0.0
        %1922 = vmatpush1.msra.mxu0 0.0
        %1923 = vmatprep.subr.mxu0 0.0
        %1924 = vmatpush1.msra.mxu0 0.0
        %1925 = vmatprep.subr.mxu0 0.0
        %1926 = vmatpush1.msra.mxu0 0.0
        %1927 = vmatprep.subr.mxu0 0.0
        %1928 = vmatpush1.msra.mxu0 0.0
        %1929 = vmatprep.subr.mxu0 0.0
        %1930 = vmatpush1.msra.mxu0 0.0
        %1931 = vmatprep.subr.mxu0 0.0
        %1932 = vmatpush1.msra.mxu0 0.0
        %1933 = vmatprep.subr.mxu0 0.0
        %1934 = vmatpush1.msra.mxu0 0.0
        %1935 = vmatprep.subr.mxu0 0.0
        %1936 = vmatpush1.msra.mxu0 0.0
        %1937 = vmatprep.subr.mxu0 0.0
        %1938 = vmatpush1.msra.mxu0 0.0
        %1939 = vmatprep.subr.mxu0 0.0
        %1940 = vmatpush1.msra.mxu0 0.0
        %1941 = vmatprep.subr.mxu0 0.0
        %1942 = vmatpush1.msra.mxu0 0.0
        %1943 = vmatprep.subr.mxu0 0.0
        %1944 = vmatpush1.msra.mxu0 0.0
        %1945 = vmatprep.subr.mxu0 0.0
        %1946 = vmatpush1.msra.mxu0 0.0
        %1947 = vmatprep.subr.mxu0 0.0
        %1948 = vmatpush1.msra.mxu0 0.0
        %1949 = vmatprep.subr.mxu0 0.0
        %1950 = vmatpush1.msra.mxu0 0.0
        %1951 = vmatprep.subr.mxu0 0.0
        %1952 = vmatpush1.msra.mxu0 0.0
        %1953 = vmatprep.subr.mxu0 0.0
        %1954 = vmatpush1.msra.mxu0 0.0
        %1955 = vmatprep.subr.mxu0 0.0
        %1956 = vmatpush1.msra.mxu0 0.0
        %1957 = vmatprep.subr.mxu0 0.0
        %1958 = vmatpush1.msra.mxu0 0.0
        %1959 = vmatprep.subr.mxu0 0.0
        %1960 = vmatpush1.msra.mxu0 0.0
        %1961 = vmatprep.subr.mxu0 0.0
        %1962 = vmatpush1.msra.mxu0 0.0
        %1963 = vmatprep.subr.mxu0 0.0
        %1964 = vmatpush1.msra.mxu0 0.0
        %1965 = vmatprep.mubr.f32.mxu0 0.0
        %1966 = vmatmul.mubr.f32.gmra.mrb[0].mxu0 %v1893
        %v1967 = vpop.f32.mrb[0].mxu0
        %v1968 = vadd.f32 0.0, %v1967
        %v1969 = vpop.f32.mrb[0].mxu0
        %v1970 = vadd.f32 0.0, %v1969
        %1971 = vdwg.mxu0
        %v1972 = vadd.f32 %v1880, %v1968
        %v1973 = vadd.f32 %v1881, %v1970
        %s1974 = scalar_lea.vmem %s5, %s1146
        %v1975 = vld [vmem:[%s1974] sm:$0xf]
        %1977 = vset.pattern.permute.xlu0 0
        %1978 = vperm.xlu0 %1977, %v1975
        %v1979 = vpop.permute.xlu0 %1978
        %v1981 = vadd.f32 %v1972, %v1979
        %v1982 = vadd.f32 %v1973, %v1979
        %v1985 = vcombine.low %v1981, %v1982
        %v1987 = vadd.f32 %v259, %v1985
      $region49: #{dblock_forward.1} parent=43 // loop_footer
        %s258 = sadd.s32 1, %s254
      $region50: #{dblock_forward.1} parent=43 // loop_footer_branch
        %253 = sbr.rel target = $region46
      $region51: #{dblock_forward.1} parent=43 // loop_exit
        _
      %1988 = vst [vmem:[%s251] sm:$0xff] %v259
      %p1989 = scmp.lt.s32.totalorder %s17, 1
      %s1990 = scalar_select %p1989, %s17, 1
      %s1991 = smul.addr %s1990, 2
      %s1992 = smul.addr %s1991, 4
      %s1993 = scalar_lea.vmem %s6, %s1992
      // Predicated region
      $region52: #{dblock_forward.1} parent=43 // pred_check
        %p1994 = pneg %p166
      $region53: #{dblock_forward.1} parent=43 // pred_check_branch
        %1996 = sbr.rel (%p1994) target = $region55
      $region54: #{dblock_forward.1} parent=43 // pred_region
        _
      $region55: #{dblock_forward.1} parent=43 // pred_fallthru
        _
    $region44: #{dblock_forward.1} parent=5 // pred_fallthru
      _
    %p1997 = scmp.le.s32.totalorder 2, %s12
    // Predicated region
    $region56: #{dblock_forward.1} parent=5 // pred_check
      %p1998 = pneg %p1997
    $region57: #{dblock_forward.1} parent=5 // pred_check_branch
      %2000 = sbr.rel (%p1998) target = $region59
    $region58: #{dblock_forward.1} parent=5 // pred_region
      %s2001 = ssub.s32 %s12, 2
      // Predicated region
      $region60: #{dblock_forward.1} parent=58 // pred_check
        %p2002 = pneg %p172
      $region61: #{dblock_forward.1} parent=58 // pred_check_branch
        %2004 = sbr.rel (%p2002) target = $region63
      $region62: #{dblock_forward.1} parent=58 // pred_region
        %p2005 = scmp.lt.s32.totalorder %s18, 1
        %s2006 = scalar_select %p2005, %s18, 1
        %s2007 = smul.addr %s2006, 2
        %s2008 = smul.addr %s2007, 4
        %s2009 = scalar_lea.vmem %s6, %s2008
      $region63: #{dblock_forward.1} parent=58 // pred_fallthru
        _
    $region59: #{dblock_forward.1} parent=5 // pred_fallthru
      _
  $region6: #{dblock_forward.1} parent=0 // loop_footer
    %s16 = sadd.s32 1, %s12
  $region7: #{dblock_forward.1} parent=0 // loop_footer_branch
    %11 = sbr.rel target = $region3
  $region8: #{dblock_forward.1} parent=0 // loop_exit
    _

</llo_original>
